<compile_context>
chip_gen: v7x
topology: tpu7x:2x2x1
jax: 0.10.0
libtpu: 0.0.40
codegen_flags: <defaults>
</compile_context>

<pallas_src>
import jax
import jax.numpy as jnp
from jax.experimental import pallas as pl
from jax.experimental.pallas import tpu as pltpu


def autoencoder_kernel(x_ref,
                       w1_ref, b1_ref,      # encoder layer 1
                       w23_ref, b23_ref,    # fused (encoder layer 2 @ decoder layer 1)
                       w4_ref, b4_ref,      # decoder layer 2
                       out_ref):
    x = x_ref[...]                                        # (TB, IN) bf16

    h1 = jnp.dot(x, w1_ref[...], preferred_element_type=jnp.float32) + b1_ref[...]
    h1 = jnp.maximum(h1, 0.0)                             # ReLU in f32 (v5e-safe)

    h2 = jnp.dot(h1.astype(w23_ref.dtype), w23_ref[...],
                 preferred_element_type=jnp.float32) + b23_ref[...]
    h2 = jnp.maximum(h2, 0.0)

    y = jnp.dot(h2.astype(w4_ref.dtype), w4_ref[...],
                preferred_element_type=jnp.float32) + b4_ref[...]

    out_ref[...] = y.astype(out_ref.dtype)                # bf16 lane-dense store


def _pick_block_b(B, max_block=2048, min_steps=4):
    """Largest multiple-of-8 tile that divides B, <= max_block, leaving >= min_steps steps."""
    if B < 8 * min_steps:
        return B                                  # tiny batch: one full-height block
    cap = min(max_block, B // min_steps)
    cap = max(8, (cap // 8) * 8)
    for cand in range(cap, 7, -8):
        if B % cand == 0:
            return cand
    return cap                                    # no divisor: ragged last tile clipped by Pallas


def autoencoder_forward(x, params, *, block_b=None):
    """x: [B, IN] (bf16 preferred). params: (w1, b1, w23, b23, w4, b4); w as [in, out]."""
    w1, b1, w23, b23, w4, b4 = params
    B, IN = x.shape
    HID = w1.shape[1]

    if block_b is None:
        block_b = _pick_block_b(B)
    nb = pl.cdiv(B, block_b)

    def resident_spec(a):
        nd = a.ndim
        return pl.BlockSpec(a.shape, lambda i, _nd=nd: (0,) * _nd)

    out_dtype = jnp.bfloat16
    flops = 2 * B * (w1.shape[0] * w1.shape[1]
                     + w23.shape[0] * w23.shape[1]
                     + w4.shape[0] * w4.shape[1])
    param_bytes = sum(int(a.size) * a.dtype.itemsize for a in params)
    bytes_accessed = (int(x.size) * x.dtype.itemsize
                      + param_bytes
                      + B * IN * jnp.dtype(out_dtype).itemsize)

    # Per-step VMEM budget: double-buffered bf16 in/out tiles + f32 intermediates + weights.
    act_bytes = 2 * 2 * block_b * IN * 2                      # in + out, 2 buffers, bf16
    inter_bytes = block_b * (HID + HID + IN) * 4              # h1, h2, y in f32
    budget = act_bytes + inter_bytes + param_bytes
    vmem_limit = int(min(32 << 20, max(8 << 20, 2 * budget)))  # safe on v5e/v6e/v7x

    out = pl.pallas_call(
        autoencoder_kernel,
        out_shape=jax.ShapeDtypeStruct((B, IN), out_dtype),
        grid=(nb,),
        in_specs=[pl.BlockSpec((block_b, IN), lambda i: (i, 0))]   # activations: pipelined
                 + [resident_spec(a) for a in params],             # params: VMEM-resident
        out_specs=pl.BlockSpec((block_b, IN), lambda i: (i, 0)),
        compiler_params=pltpu.CompilerParams(
            dimension_semantics=("parallel",),                     # megacore split on v7x
            vmem_limit_bytes=vmem_limit),
        cost_estimate=pl.CostEstimate(flops=flops, transcendentals=0,
                                      bytes_accessed=bytes_accessed),
    )(x, *params)
    return out


def init_linear(key, fan_in, fan_out, dtype=jnp.float32):
    """PyTorch nn.Linear default init: U(-1/sqrt(fan_in), 1/sqrt(fan_in))."""
    kw, kb = jax.random.split(key)
    bound = 1.0 / float(fan_in) ** 0.5
    w = jax.random.uniform(kw, (fan_in, fan_out), dtype, -bound, bound)  # [in, out]
    b = jax.random.uniform(kb, (1, fan_out), dtype, -bound, bound)
    return w, b


if __name__ == "__main__":
    # B=2048 with an auto-picked 512-row tile -> 4 grid steps (>=2 per core on v7x).
    B, IN, HID, LAT = 2048, 256, 128, 64

    key = jax.random.PRNGKey(0)
    kx, k1, k2, k3, k4 = jax.random.split(key, 5)

    x_f32 = jax.random.normal(kx, (B, IN), jnp.float32)

    w1, b1 = init_linear(k1, IN, HID)     # encoder layer 1
    w2, b2 = init_linear(k2, HID, LAT)    # encoder layer 2 (latent, no activation)
    w3, b3 = init_linear(k3, LAT, HID)    # decoder layer 1
    w4, b4 = init_linear(k4, HID, IN)     # decoder layer 2 (reconstruction)

    # Host-side algebraic fusion of the two un-activated middle linears (exact in f32).
    w23 = w2 @ w3                          # (HID, HID)
    b23 = b2 @ w3 + b3                     # (1, HID)

    # bf16 storage for x + weights (half the DMA bytes, bf16 MXU rate);
    # biases stay f32 and are added to the f32 accumulators.
    bf16 = lambda a: a.astype(jnp.bfloat16)
    params_kernel = (bf16(w1), b1, bf16(w23), b23, bf16(w4), b4)
    x_bf16 = bf16(x_f32)

    out = autoencoder_forward(x_bf16, params_kernel)
    jax.block_until_ready(out)
    assert out.shape == (B, IN) and out.dtype == jnp.bfloat16

    # Reference 1: identical mixed-precision math in plain JAX (tight tolerance).
    def ref_mixed(x, p):
        rw1, rb1, rw23, rb23, rw4, rb4 = p
        h1 = jnp.maximum(jnp.dot(x, rw1, preferred_element_type=jnp.float32) + rb1, 0.0)
        h2 = jnp.maximum(jnp.dot(h1.astype(jnp.bfloat16), rw23,
                                 preferred_element_type=jnp.float32) + rb23, 0.0)
        y = jnp.dot(h2.astype(jnp.bfloat16), rw4,
                    preferred_element_type=jnp.float32) + rb4
        return y.astype(jnp.bfloat16)

    ref = ref_mixed(x_bf16, params_kernel)
    assert jnp.allclose(out.astype(jnp.float32), ref.astype(jnp.float32),
                        atol=2e-2, rtol=2e-2), "mismatch vs mixed-precision ref"

    # Reference 2: original full-f32, unfused, unpadded forward (loose tolerance —
    # only bf16 quantization separates them; checks module semantics preserved).
    def ref_f32(x, p):
        rw1, rb1, rw2, rb2, rw3, rb3, rw4, rb4 = p
        h1 = jnp.maximum(x @ rw1 + rb1, 0.0)
        z = h1 @ rw2 + rb2
        h2 = jnp.maximum(z @ rw3 + rb3, 0.0)
        return h2 @ rw4 + rb4

    ref32 = ref_f32(x_f32, (w1, b1, w2, b2, w3, b3, w4, b4))
    assert jnp.allclose(out.astype(jnp.float32), ref32,
                        atol=1e-1, rtol=1e-1), "mismatch vs f32 ref"

    print("KERNEL_OK")
</pallas_src>

<mosaic_0001>
module attributes {stable_mosaic.version = 11 : i64} {
  func.func @autoencoder_kernel(%arg0: i32, %arg1: memref<512x256xbf16, #tpu.memory_space<vmem>>, %arg2: memref<256x128xbf16, #tpu.memory_space<vmem>>, %arg3: memref<1x128xf32, #tpu.memory_space<vmem>>, %arg4: memref<128x128xbf16, #tpu.memory_space<vmem>>, %arg5: memref<1x128xf32, #tpu.memory_space<vmem>>, %arg6: memref<128x256xbf16, #tpu.memory_space<vmem>>, %arg7: memref<1x256xf32, #tpu.memory_space<vmem>>, %arg8: memref<512x256xbf16, #tpu.memory_space<vmem>>) attributes {dimension_semantics = [#tpu.dimension_semantics<parallel>], iteration_bounds = array<i64: 4>, scalar_prefetch = 0 : i64, scratch_operands = 0 : i64, tpu.core_type = #tpu.core_type<tc>, window_params = [{transform_indices = @transform_0, window_bounds = array<i64: 512, 256>}, {pipeline_mode = #tpu.pipeline_mode<synchronous>, transform_indices = @transform_1, window_bounds = array<i64: 256, 128>}, {pipeline_mode = #tpu.pipeline_mode<synchronous>, transform_indices = @transform_2, window_bounds = array<i64: 1, 128>}, {pipeline_mode = #tpu.pipeline_mode<synchronous>, transform_indices = @transform_3, window_bounds = array<i64: 128, 128>}, {pipeline_mode = #tpu.pipeline_mode<synchronous>, transform_indices = @transform_4, window_bounds = array<i64: 1, 128>}, {pipeline_mode = #tpu.pipeline_mode<synchronous>, transform_indices = @transform_5, window_bounds = array<i64: 128, 256>}, {pipeline_mode = #tpu.pipeline_mode<synchronous>, transform_indices = @transform_6, window_bounds = array<i64: 1, 256>}, {transform_indices = @transform_7, window_bounds = array<i64: 512, 256>}]} {
    %c0 = arith.constant 0 : index
    %c0_0 = arith.constant 0 : index
    %0 = vector.load %arg1[%c0, %c0_0] : memref<512x256xbf16, #tpu.memory_space<vmem>>, vector<512x256xbf16>
    %c0_1 = arith.constant 0 : index
    %c0_2 = arith.constant 0 : index
    %1 = vector.load %arg2[%c0_1, %c0_2] : memref<256x128xbf16, #tpu.memory_space<vmem>>, vector<256x128xbf16>
    %cst = arith.constant dense<0.000000e+00> : vector<512x128xf32>
    %2 = tpu.matmul %0, %1, %cst {dimension_numbers = #tpu.dot_dimension_numbers<[1], [0], [0], [1], [0, 0, 1, 1], [], []>} : vector<512x256xbf16>, vector<256x128xbf16>, vector<512x128xf32> -> vector<512x128xf32>
    %c0_3 = arith.constant 0 : index
    %c0_4 = arith.constant 0 : index
    %3 = vector.load %arg3[%c0_3, %c0_4] : memref<1x128xf32, #tpu.memory_space<vmem>>, vector<1x128xf32>
    %4 = vector.broadcast %3 : vector<1x128xf32> to vector<512x128xf32>
    %5 = arith.addf %2, %4 : vector<512x128xf32>
    %cst_5 = arith.constant 0.000000e+00 : f32
    %6 = vector.broadcast %cst_5 : f32 to vector<512x128xf32>
    %7 = arith.maximumf %5, %6 : vector<512x128xf32>
    %8 = arith.truncf %7 : vector<512x128xf32> to vector<512x128xbf16>
    %c0_6 = arith.constant 0 : index
    %c0_7 = arith.constant 0 : index
    %9 = vector.load %arg4[%c0_6, %c0_7] : memref<128x128xbf16, #tpu.memory_space<vmem>>, vector<128x128xbf16>
    %cst_8 = arith.constant dense<0.000000e+00> : vector<512x128xf32>
    %10 = tpu.matmul %8, %9, %cst_8 {dimension_numbers = #tpu.dot_dimension_numbers<[1], [0], [0], [1], [0, 0, 1, 1], [], []>} : vector<512x128xbf16>, vector<128x128xbf16>, vector<512x128xf32> -> vector<512x128xf32>
    %c0_9 = arith.constant 0 : index
    %c0_10 = arith.constant 0 : index
    %11 = vector.load %arg5[%c0_9, %c0_10] : memref<1x128xf32, #tpu.memory_space<vmem>>, vector<1x128xf32>
    %12 = vector.broadcast %11 : vector<1x128xf32> to vector<512x128xf32>
    %13 = arith.addf %10, %12 : vector<512x128xf32>
    %cst_11 = arith.constant 0.000000e+00 : f32
    %14 = vector.broadcast %cst_11 : f32 to vector<512x128xf32>
    %15 = arith.maximumf %13, %14 : vector<512x128xf32>
    %16 = arith.truncf %15 : vector<512x128xf32> to vector<512x128xbf16>
    %c0_12 = arith.constant 0 : index
    %c0_13 = arith.constant 0 : index
    %17 = vector.load %arg6[%c0_12, %c0_13] : memref<128x256xbf16, #tpu.memory_space<vmem>>, vector<128x256xbf16>
    %cst_14 = arith.constant dense<0.000000e+00> : vector<512x256xf32>
    %18 = tpu.matmul %16, %17, %cst_14 {dimension_numbers = #tpu.dot_dimension_numbers<[1], [0], [0], [1], [0, 0, 1, 1], [], []>} : vector<512x128xbf16>, vector<128x256xbf16>, vector<512x256xf32> -> vector<512x256xf32>
    %c0_15 = arith.constant 0 : index
    %c0_16 = arith.constant 0 : index
    %19 = vector.load %arg7[%c0_15, %c0_16] : memref<1x256xf32, #tpu.memory_space<vmem>>, vector<1x256xf32>
    %20 = vector.broadcast %19 : vector<1x256xf32> to vector<512x256xf32>
    %21 = arith.addf %18, %20 : vector<512x256xf32>
    %22 = arith.truncf %21 : vector<512x256xf32> to vector<512x256xbf16>
    %c0_17 = arith.constant 0 : index
    %c0_18 = arith.constant 0 : index
    %23 = vector.load %arg8[%c0_17, %c0_18] : memref<512x256xbf16, #tpu.memory_space<vmem>>, vector<512x256xbf16>
    tpu.vector_store %arg8[%c0_17, %c0_18], %22 {strides = array<i32>} : memref<512x256xbf16, #tpu.memory_space<vmem>>, vector<512x256xbf16>,
    return
  }
  func.func @transform_0(%arg0: i32) -> (i32, i32) {
    %c0_i32 = arith.constant 0 : i32
    %c0_i32_0 = arith.constant 0 : i32
    return %arg0, %c0_i32 : i32, i32
  }
  func.func @transform_1(%arg0: i32) -> (i32, i32) {
    %c0_i32 = arith.constant 0 : i32
    %c0_i32_0 = arith.constant 0 : i32
    %c0_i32_1 = arith.constant 0 : i32
    return %c0_i32, %c0_i32_0 : i32, i32
  }
  func.func @transform_2(%arg0: i32) -> (i32, i32) {
    %c0_i32 = arith.constant 0 : i32
    %c0_i32_0 = arith.constant 0 : i32
    %c0_i32_1 = arith.constant 0 : i32
    return %c0_i32, %c0_i32_0 : i32, i32
  }
  func.func @transform_3(%arg0: i32) -> (i32, i32) {
    %c0_i32 = arith.constant 0 : i32
    %c0_i32_0 = arith.constant 0 : i32
    %c0_i32_1 = arith.constant 0 : i32
    return %c0_i32, %c0_i32_0 : i32, i32
  }
  func.func @transform_4(%arg0: i32) -> (i32, i32) {
    %c0_i32 = arith.constant 0 : i32
    %c0_i32_0 = arith.constant 0 : i32
    %c0_i32_1 = arith.constant 0 : i32
    return %c0_i32, %c0_i32_0 : i32, i32
  }
  func.func @transform_5(%arg0: i32) -> (i32, i32) {
    %c0_i32 = arith.constant 0 : i32
    %c0_i32_0 = arith.constant 0 : i32
    %c0_i32_1 = arith.constant 0 : i32
    return %c0_i32, %c0_i32_0 : i32, i32
  }
  func.func @transform_6(%arg0: i32) -> (i32, i32) {
    %c0_i32 = arith.constant 0 : i32
    %c0_i32_0 = arith.constant 0 : i32
    %c0_i32_1 = arith.constant 0 : i32
    return %c0_i32, %c0_i32_0 : i32, i32
  }
  func.func @transform_7(%arg0: i32) -> (i32, i32) {
    %c0_i32 = arith.constant 0 : i32
    %c0_i32_0 = arith.constant 0 : i32
    return %arg0, %c0_i32 : i32, i32
  }
}

</mosaic_0001>

<llo_original>
// kernel: tpu_custom_call.1
$region0: #{tpu_custom_call.1}
  #allocation0 [shape = 'u32[]', space=smem, size = 0x4, offset = 0x4, fixed_abs, tag = 'smem constant byte address 0x4 - core index']
  #allocation1 [shape = 'u32[144,128]{1,0:T(1,128)}', space=vmem, size = 0x12000, scoped, tag = 'internal scratch']
  %s0 = inlined_call_operand.hbm [shape: bf16[2048,256], index: 0, kind: input, shape index: {}]
  %s1 = inlined_call_operand.hbm [shape: bf16[256,128], index: 1, kind: input, shape index: {}]
  %s2 = inlined_call_operand.vmem [shape: f32[1,128], index: 2, kind: input, shape index: {}]
  %s3 = inlined_call_operand.hbm [shape: bf16[128,128], index: 3, kind: input, shape index: {}]
  %s4 = inlined_call_operand.vmem [shape: f32[1,128], index: 4, kind: input, shape index: {}]
  %s5 = inlined_call_operand.hbm [shape: bf16[128,256], index: 5, kind: input, shape index: {}]
  %s6 = inlined_call_operand.vmem [shape: f32[1,256], index: 6, kind: input, shape index: {}]
  %s7 = inlined_call_operand.hbm [shape: bf16[2048,256], index: 7, kind: output, shape index: {}]
  %s8 = sld [smem:[#allocation0]]
  $region77: #{tpu_custom_call.1} parent=0
    _
  %s10 = ssub.s32 1, %s8
  %s11 = scalar_select 0, %s10, %s8
  $region1: #{tpu_custom_call.1} parent=0
    #allocation2 [shape = 'u8[524288]{0}', space=vmem, size = 0x80000, scoped, tag = 'input window, operand 0']
    #allocation3 [shape = 's32[2]{0}', space=sflag, size = 0x8, scoped, tag = 'scoped memory for tpu_custom_call.1']
    #allocation4 [shape = 's32[2]{0}', space=sflag, size = 0x8, scoped, tag = 'scoped memory for tpu_custom_call.1']
    #allocation5 [shape = 'u8[65536]{0}', space=vmem, size = 0x10000, scoped, tag = 'input window, operand 1, single buffered']
    #allocation6 [shape = 's32[1]{0}', space=sflag, size = 0x4, scoped, tag = 'scoped memory for tpu_custom_call.1']
    #allocation7 [shape = 'u8[32768]{0}', space=vmem, size = 0x8000, scoped, tag = 'input window, operand 3, single buffered']
    #allocation8 [shape = 'u8[65536]{0}', space=vmem, size = 0x10000, scoped, tag = 'input window, operand 5, single buffered']
    #allocation9 [shape = 's32[1]{0}', space=sflag, size = 0x4, scoped, tag = 'scoped memory for tpu_custom_call.1']
    #allocation10 [shape = 'u8[524288]{0}', space=vmem, size = 0x80000, scoped, tag = 'output window, operand 0']
    %12 = vsyncpa [#allocation3], 0
    %s13 = scalar_lea.sflag [#allocation3], 1
    %14 = vsyncpa %s13, 0
    %15 = vsyncpa [#allocation6], 0
    %16 = vsyncpa [#allocation9], 0
    %17 = vsyncpa [#allocation4], 0
    %s18 = scalar_lea.sflag [#allocation4], 1
    %19 = vsyncpa %s18, 0
    loop: start=0, step=1, limit=6
    $region2: #{tpu_custom_call.1} parent=1 // loop_pre_header
      _
    $region3: #{tpu_custom_call.1} parent=1 // loop_header
      %s21 = sphi 0, %s25
      %p22 = scmp.ge.s32.totalorder %s21, 6
      %s31 = sphi 0, %s33
      %s34 = sphi 0, %s31
      %s35 = sphi 0, %s34
      %s51 = sphi 0, %s35
      %s55 = sphi 0, %s55
      %s57 = sphi 0, %s55
      %s58 = sphi 0, %s57
      %s72 = sphi 0, %s58
      %s76 = sphi 0, %s76
      %s78 = sphi 0, %s76
      %s79 = sphi 0, %s78
      %s93 = sphi 0, %s79
      %s97 = sphi 0, %s97
      %s99 = sphi 0, %s97
      %s100 = sphi 0, %s99
      %s114 = sphi 0, %s100
      %s118 = sphi 0, %s118
      %s120 = sphi 0, %s118
      %s121 = sphi 0, %s120
      %s135 = sphi 0, %s121
      %s139 = sphi 0, %s139
      %s141 = sphi 0, %s139
      %s142 = sphi 0, %s141
      %s156 = sphi 0, %s142
      %s160 = sphi 0, %s160
      %s162 = sphi 0, %s160
      %s163 = sphi 0, %s162
      %s177 = sphi 0, %s163
      %s183 = sphi 0, %s185
      %s186 = sphi 0, %s183
      %s187 = sphi 0, %s186
      %s203 = sphi 0, %s187
    $region4: #{tpu_custom_call.1} parent=1 // loop_header_branch
      %24 = sbr.rel (%p22) target = $region8
    $region5: #{tpu_custom_call.1} parent=1 // loop_body
      %s26 = ssub.s32 %s21, 1
      %s27 = ssub.s32 %s21, 2
      %s28 = sadd.s32 %s21, 1
      %s29 = ssub.s32 %s21, %s28
      %p30 = scmp.eq.s32.totalorder %s29, 0
      %s32 = sadd.s32 %s31, 1
      %s33 = scalar_select %p30, %s31, %s32
      %p36 = pneg %p30
      %p37 = scmp.eq.s32.totalorder %s21, 3
      %p38 = por %p36, %p37
      %p39 = scmp.ne.s32.totalorder %s31, %s34
      %p40 = scmp.eq.s32.totalorder %s21, 0
      %p41 = por %p39, %p40
      %p42 = scmp.ne.s32.totalorder %s31, %s34
      %p43 = scmp.eq.s32.totalorder %s26, 3
      %p44 = por %p42, %p43
      %p45 = scmp.ne.s32.totalorder %s34, %s35
      %p46 = scmp.eq.s32.totalorder %s26, 0
      %p47 = por %p45, %p46
      %p48 = scmp.ne.s32.totalorder %s34, %s35
      %p49 = scmp.eq.s32.totalorder %s27, 3
      %p50 = por %p48, %p49
      %p52 = scmp.ne.s32.totalorder %s35, %s51
      %p53 = scmp.eq.s32.totalorder %s27, 0
      %p54 = por %p52, %p53
      %s56 = sadd.s32 %s55, 1
      %p59 = scmp.eq.s32.totalorder %s21, 3
      %p60 = scmp.ne.s32.totalorder %s55, %s57
      %p61 = scmp.eq.s32.totalorder %s21, 0
      %p62 = por %p60, %p61
      %p63 = scmp.ne.s32.totalorder %s55, %s57
      %p64 = scmp.eq.s32.totalorder %s26, 3
      %p65 = por %p63, %p64
      %p66 = scmp.ne.s32.totalorder %s57, %s58
      %p67 = scmp.eq.s32.totalorder %s26, 0
      %p68 = por %p66, %p67
      %p69 = scmp.ne.s32.totalorder %s57, %s58
      %p70 = scmp.eq.s32.totalorder %s27, 3
      %p71 = por %p69, %p70
      %p73 = scmp.ne.s32.totalorder %s58, %s72
      %p74 = scmp.eq.s32.totalorder %s27, 0
      %p75 = por %p73, %p74
      %s77 = sadd.s32 %s76, 1
      %p80 = scmp.eq.s32.totalorder %s21, 3
      %p81 = scmp.ne.s32.totalorder %s76, %s78
      %p82 = scmp.eq.s32.totalorder %s21, 0
      %p83 = por %p81, %p82
      %p84 = scmp.ne.s32.totalorder %s76, %s78
      %p85 = scmp.eq.s32.totalorder %s26, 3
      %p86 = por %p84, %p85
      %p87 = scmp.ne.s32.totalorder %s78, %s79
      %p88 = scmp.eq.s32.totalorder %s26, 0
      %p89 = por %p87, %p88
      %p90 = scmp.ne.s32.totalorder %s78, %s79
      %p91 = scmp.eq.s32.totalorder %s27, 3
      %p92 = por %p90, %p91
      %p94 = scmp.ne.s32.totalorder %s79, %s93
      %p95 = scmp.eq.s32.totalorder %s27, 0
      %p96 = por %p94, %p95
      %s98 = sadd.s32 %s97, 1
      %p101 = scmp.eq.s32.totalorder %s21, 3
      %p102 = scmp.ne.s32.totalorder %s97, %s99
      %p103 = scmp.eq.s32.totalorder %s21, 0
      %p104 = por %p102, %p103
      %p105 = scmp.ne.s32.totalorder %s97, %s99
      %p106 = scmp.eq.s32.totalorder %s26, 3
      %p107 = por %p105, %p106
      %p108 = scmp.ne.s32.totalorder %s99, %s100
      %p109 = scmp.eq.s32.totalorder %s26, 0
      %p110 = por %p108, %p109
      %p111 = scmp.ne.s32.totalorder %s99, %s100
      %p112 = scmp.eq.s32.totalorder %s27, 3
      %p113 = por %p111, %p112
      %p115 = scmp.ne.s32.totalorder %s100, %s114
      %p116 = scmp.eq.s32.totalorder %s27, 0
      %p117 = por %p115, %p116
      %s119 = sadd.s32 %s118, 1
      %p122 = scmp.eq.s32.totalorder %s21, 3
      %p123 = scmp.ne.s32.totalorder %s118, %s120
      %p124 = scmp.eq.s32.totalorder %s21, 0
      %p125 = por %p123, %p124
      %p126 = scmp.ne.s32.totalorder %s118, %s120
      %p127 = scmp.eq.s32.totalorder %s26, 3
      %p128 = por %p126, %p127
      %p129 = scmp.ne.s32.totalorder %s120, %s121
      %p130 = scmp.eq.s32.totalorder %s26, 0
      %p131 = por %p129, %p130
      %p132 = scmp.ne.s32.totalorder %s120, %s121
      %p133 = scmp.eq.s32.totalorder %s27, 3
      %p134 = por %p132, %p133
      %p136 = scmp.ne.s32.totalorder %s121, %s135
      %p137 = scmp.eq.s32.totalorder %s27, 0
      %p138 = por %p136, %p137
      %s140 = sadd.s32 %s139, 1
      %p143 = scmp.eq.s32.totalorder %s21, 3
      %p144 = scmp.ne.s32.totalorder %s139, %s141
      %p145 = scmp.eq.s32.totalorder %s21, 0
      %p146 = por %p144, %p145
      %p147 = scmp.ne.s32.totalorder %s139, %s141
      %p148 = scmp.eq.s32.totalorder %s26, 3
      %p149 = por %p147, %p148
      %p150 = scmp.ne.s32.totalorder %s141, %s142
      %p151 = scmp.eq.s32.totalorder %s26, 0
      %p152 = por %p150, %p151
      %p153 = scmp.ne.s32.totalorder %s141, %s142
      %p154 = scmp.eq.s32.totalorder %s27, 3
      %p155 = por %p153, %p154
      %p157 = scmp.ne.s32.totalorder %s142, %s156
      %p158 = scmp.eq.s32.totalorder %s27, 0
      %p159 = por %p157, %p158
      %s161 = sadd.s32 %s160, 1
      %p164 = scmp.eq.s32.totalorder %s21, 3
      %p165 = scmp.ne.s32.totalorder %s160, %s162
      %p166 = scmp.eq.s32.totalorder %s21, 0
      %p167 = por %p165, %p166
      %p168 = scmp.ne.s32.totalorder %s160, %s162
      %p169 = scmp.eq.s32.totalorder %s26, 3
      %p170 = por %p168, %p169
      %p171 = scmp.ne.s32.totalorder %s162, %s163
      %p172 = scmp.eq.s32.totalorder %s26, 0
      %p173 = por %p171, %p172
      %p174 = scmp.ne.s32.totalorder %s162, %s163
      %p175 = scmp.eq.s32.totalorder %s27, 3
      %p176 = por %p174, %p175
      %p178 = scmp.ne.s32.totalorder %s163, %s177
      %p179 = scmp.eq.s32.totalorder %s27, 0
      %p180 = por %p178, %p179
      %s181 = ssub.s32 %s21, %s28
      %p182 = scmp.eq.s32.totalorder %s181, 0
      %s184 = sadd.s32 %s183, 1
      %s185 = scalar_select %p182, %s183, %s184
      %p188 = pneg %p182
      %p189 = scmp.eq.s32.totalorder %s21, 3
      %p190 = por %p188, %p189
      %p191 = scmp.ne.s32.totalorder %s183, %s186
      %p192 = scmp.eq.s32.totalorder %s21, 0
      %p193 = por %p191, %p192
      %p194 = scmp.ne.s32.totalorder %s183, %s186
      %p195 = scmp.eq.s32.totalorder %s26, 3
      %p196 = por %p194, %p195
      %p197 = scmp.ne.s32.totalorder %s186, %s187
      %p198 = scmp.eq.s32.totalorder %s26, 0
      %p199 = por %p197, %p198
      %p200 = scmp.ne.s32.totalorder %s186, %s187
      %p201 = scmp.eq.s32.totalorder %s27, 3
      %p202 = por %p200, %p201
      %p204 = scmp.ne.s32.totalorder %s187, %s203
      %p205 = scmp.eq.s32.totalorder %s27, 0
      %p206 = por %p204, %p205
      %p207 = scmp.le.s32.totalorder 1, %s21
      %p208 = scmp.lt.s32.totalorder %s21, 5
      %p209 = pnand %p207, %p208
      %p210 = pneg %p209
      // Predicated region
      $region9: #{tpu_custom_call.1} parent=5 // pred_check
        _
      $region10: #{tpu_custom_call.1} parent=5 // pred_check_branch
        %212 = sbr.rel (%p209) target = $region12
      $region11: #{tpu_custom_call.1} parent=5 // pred_region
        %s213 = ssub.s32 %s21, 1
        // Predicated region
        $region13: #{tpu_custom_call.1} parent=11 // pred_check
          %p214 = pneg %p68
        $region14: #{tpu_custom_call.1} parent=11 // pred_check_branch
          %216 = sbr.rel (%p214) target = $region16
        $region15: #{tpu_custom_call.1} parent=11 // pred_region
          %s218 = ssub.s32 2048, 2048
          %219 = vsyncadd [#allocation6], %s218
          %s220 = sshll.u32 [#allocation5], 4
          %s221 = int_to_ptr.vmem [resolvable:$true] %s220
          %226 = dma.hbm_to_vmem [thread:$0]  %s1, 2048, %s221, [#allocation6], 64, 64, 4
        $region16: #{tpu_custom_call.1} parent=11 // pred_fallthru
          _
        // Predicated region
        $region17: #{tpu_custom_call.1} parent=11 // pred_check
          %p227 = pneg %p89
        $region18: #{tpu_custom_call.1} parent=11 // pred_check_branch
          %229 = sbr.rel (%p227) target = $region20
        $region19: #{tpu_custom_call.1} parent=11 // pred_region
          _
        $region20: #{tpu_custom_call.1} parent=11 // pred_fallthru
          _
        // Predicated region
        $region21: #{tpu_custom_call.1} parent=11 // pred_check
          %p230 = pneg %p110
        $region22: #{tpu_custom_call.1} parent=11 // pred_check_branch
          %232 = sbr.rel (%p230) target = $region24
        $region23: #{tpu_custom_call.1} parent=11 // pred_region
          %s234 = ssub.s32 1024, 1024
          %235 = vsyncadd [#allocation6], %s234
          %s236 = sshll.u32 [#allocation7], 4
          %s237 = int_to_ptr.vmem [resolvable:$true] %s236
          %242 = dma.hbm_to_vmem [thread:$0]  %s3, 1024, %s237, [#allocation6], 64, 64, 4
        $region24: #{tpu_custom_call.1} parent=11 // pred_fallthru
          _
        // Predicated region
        $region25: #{tpu_custom_call.1} parent=11 // pred_check
          %p243 = pneg %p131
        $region26: #{tpu_custom_call.1} parent=11 // pred_check_branch
          %245 = sbr.rel (%p243) target = $region28
        $region27: #{tpu_custom_call.1} parent=11 // pred_region
          _
        $region28: #{tpu_custom_call.1} parent=11 // pred_fallthru
          _
        // Predicated region
        $region29: #{tpu_custom_call.1} parent=11 // pred_check
          %p246 = pneg %p152
        $region30: #{tpu_custom_call.1} parent=11 // pred_check_branch
          %248 = sbr.rel (%p246) target = $region32
        $region31: #{tpu_custom_call.1} parent=11 // pred_region
          %s250 = ssub.s32 2048, 2048
          %251 = vsyncadd [#allocation9], %s250
          %s252 = sshll.u32 [#allocation8], 4
          %s253 = int_to_ptr.vmem [resolvable:$true] %s252
          %258 = dma.hbm_to_vmem [thread:$0]  %s5, 2048, %s253, [#allocation9], 128, 128, 8
        $region32: #{tpu_custom_call.1} parent=11 // pred_fallthru
          _
        // Predicated region
        $region33: #{tpu_custom_call.1} parent=11 // pred_check
          %p259 = pneg %p173
        $region34: #{tpu_custom_call.1} parent=11 // pred_check_branch
          %261 = sbr.rel (%p259) target = $region36
        $region35: #{tpu_custom_call.1} parent=11 // pred_region
          _
        $region36: #{tpu_custom_call.1} parent=11 // pred_fallthru
          _
      $region12: #{tpu_custom_call.1} parent=5 // pred_fallthru
        _
      %p262 = scmp.lt.s32.totalorder %s21, 4
      // Predicated region
      $region37: #{tpu_custom_call.1} parent=5 // pred_check
        %p263 = pneg %p262
      $region38: #{tpu_custom_call.1} parent=5 // pred_check_branch
        %265 = sbr.rel (%p263) target = $region40
      $region39: #{tpu_custom_call.1} parent=5 // pred_region
        // Predicated region
        $region41: #{tpu_custom_call.1} parent=39 // pred_check
          %p266 = pneg %p41
        $region42: #{tpu_custom_call.1} parent=39 // pred_check_branch
          %268 = sbr.rel (%p266) target = $region44
        $region43: #{tpu_custom_call.1} parent=39 // pred_region
          %s269 = sand.u32 %s31, 1
          %s270 = scalar_lea.sflag [#allocation3], %s269
          %s271 = sand.u32 %s31, 1
          %s272 = smul.addr %s271, 512
          %s273 = scalar_lea.vmem [#allocation2], %s272
          %s274 = smul.u32 64, %s21
          %s276 = ssub.s32 8192, 8192
          %277 = vsyncadd %s270, %s276
          %s278 = smul.addr %s274, 2
          %s279 = smul.addr %s278, 64
          %s280 = scalar_lea.hbm %s0, %s279
          %s281 = sshll.u32 %s273, 4
          %s282 = int_to_ptr.vmem [resolvable:$true] %s281
          %287 = dma.hbm_to_vmem [thread:$0]  %s280, 8192, %s282, %s270, 128, 128, 8
        $region44: #{tpu_custom_call.1} parent=39 // pred_fallthru
          _
      $region40: #{tpu_custom_call.1} parent=5 // pred_fallthru
        _
      %p288 = scmp.le.s32.totalorder 1, %s21
      %p289 = scmp.lt.s32.totalorder %s21, 5
      %p290 = pnand %p288, %p289
      %p291 = pneg %p290
      // Predicated region
      $region45: #{tpu_custom_call.1} parent=5 // pred_check
        _
      $region46: #{tpu_custom_call.1} parent=5 // pred_check_branch
        %293 = sbr.rel (%p290) target = $region48
      $region47: #{tpu_custom_call.1} parent=5 // pred_region
        %s294 = ssub.s32 %s21, 1
        %s295 = sand.u32 %s34, 1
        %s296 = scalar_lea.sflag [#allocation3], %s295
        %s297 = sand.u32 %s34, 1
        %s298 = smul.addr %s297, 512
        %s299 = scalar_lea.vmem [#allocation2], %s298
        // Predicated region
        $region49: #{tpu_custom_call.1} parent=47 // pred_check
          %p300 = pneg %p47
        $region50: #{tpu_custom_call.1} parent=47 // pred_check_branch
          %302 = sbr.rel (%p300) target = $region52
        $region51: #{tpu_custom_call.1} parent=47 // pred_region
          %303 = dma.done %s296, 8192
        $region52: #{tpu_custom_call.1} parent=47 // pred_fallthru
          _
        // Predicated region
        $region53: #{tpu_custom_call.1} parent=47 // pred_check
          %p304 = pneg %p68
        $region54: #{tpu_custom_call.1} parent=47 // pred_check_branch
          %306 = sbr.rel (%p304) target = $region56
        $region55: #{tpu_custom_call.1} parent=47 // pred_region
          %307 = dma.done [#allocation6], 2048
        $region56: #{tpu_custom_call.1} parent=47 // pred_fallthru
          _
        // Predicated region
        $region57: #{tpu_custom_call.1} parent=47 // pred_check
          %p308 = pneg %p110
        $region58: #{tpu_custom_call.1} parent=47 // pred_check_branch
          %310 = sbr.rel (%p308) target = $region60
        $region59: #{tpu_custom_call.1} parent=47 // pred_region
          %311 = dma.done [#allocation6], 1024
        $region60: #{tpu_custom_call.1} parent=47 // pred_fallthru
          _
        // Predicated region
        $region61: #{tpu_custom_call.1} parent=47 // pred_check
          %p312 = pneg %p152
        $region62: #{tpu_custom_call.1} parent=47 // pred_check_branch
          %314 = sbr.rel (%p312) target = $region64
        $region63: #{tpu_custom_call.1} parent=47 // pred_region
          %315 = dma.done [#allocation9], 2048
        $region64: #{tpu_custom_call.1} parent=47 // pred_fallthru
          _
        %s316 = sand.u32 %s34, 1
        %s317 = scalar_lea.sflag [#allocation3], %s316
        %s318 = sand.u32 %s34, 1
        %s319 = smul.addr %s318, 512
        %s320 = scalar_lea.vmem [#allocation2], %s319
        %p321 = pneg %p47
        %p322 = pneg %p44
        %p323 = pneg %p68
        %p324 = pneg %p65
        %p325 = pneg %p89
        %p326 = pneg %p86
        %p327 = pneg %p110
        %p328 = pneg %p107
        %p329 = pneg %p131
        %p330 = pneg %p128
        %p331 = pneg %p152
        %p332 = pneg %p149
        %p333 = pneg %p173
        %p334 = pneg %p170
        %p335 = pneg %p199
        %p336 = pneg %p196
        %s337 = sand.u32 %s186, 1
        %s338 = scalar_lea.sflag [#allocation4], %s337
        %s339 = sand.u32 %s186, 1
        %s340 = smul.addr %s339, 512
        %s341 = scalar_lea.vmem [#allocation10], %s340
        %s342 = smul.u32 64, %s26
        %s343 = smul.u32 64, %s26
        %v345 = vld [vmem:[%s299] sm:$0xff]
        %v346 = vld [vmem:[%s299 + $0x8] sm:$0xff]
        %v347 = vld [vmem:[%s299 + $0x10] sm:$0xff]
        %v348 = vld [vmem:[%s299 + $0x18] sm:$0xff]
        %v349 = vld [vmem:[%s299 + $0x20] sm:$0xff]
        %v350 = vld [vmem:[%s299 + $0x28] sm:$0xff]
        %v351 = vld [vmem:[%s299 + $0x30] sm:$0xff]
        %v352 = vld [vmem:[%s299 + $0x38] sm:$0xff]
        %v353 = vld [vmem:[%s299 + $0x40] sm:$0xff]
        %v354 = vld [vmem:[%s299 + $0x48] sm:$0xff]
        %v355 = vld [vmem:[%s299 + $0x50] sm:$0xff]
        %v356 = vld [vmem:[%s299 + $0x58] sm:$0xff]
        %v357 = vld [vmem:[%s299 + $0x60] sm:$0xff]
        %v358 = vld [vmem:[%s299 + $0x68] sm:$0xff]
        %v359 = vld [vmem:[%s299 + $0x70] sm:$0xff]
        %v360 = vld [vmem:[%s299 + $0x78] sm:$0xff]
        %v361 = vld [vmem:[%s299 + $0x80] sm:$0xff]
        %v362 = vld [vmem:[%s299 + $0x88] sm:$0xff]
        %v363 = vld [vmem:[%s299 + $0x90] sm:$0xff]
        %v364 = vld [vmem:[%s299 + $0x98] sm:$0xff]
        %v365 = vld [vmem:[%s299 + $0xa0] sm:$0xff]
        %v366 = vld [vmem:[%s299 + $0xa8] sm:$0xff]
        %v367 = vld [vmem:[%s299 + $0xb0] sm:$0xff]
        %v368 = vld [vmem:[%s299 + $0xb8] sm:$0xff]
        %v369 = vld [vmem:[%s299 + $0xc0] sm:$0xff]
        %v370 = vld [vmem:[%s299 + $0xc8] sm:$0xff]
        %v371 = vld [vmem:[%s299 + $0xd0] sm:$0xff]
        %v372 = vld [vmem:[%s299 + $0xd8] sm:$0xff]
        %v373 = vld [vmem:[%s299 + $0xe0] sm:$0xff]
        %v374 = vld [vmem:[%s299 + $0xe8] sm:$0xff]
        %v375 = vld [vmem:[%s299 + $0xf0] sm:$0xff]
        %v376 = vld [vmem:[%s299 + $0xf8] sm:$0xff]
        %v377 = vld [vmem:[%s299 + $0x100] sm:$0xff]
        %v378 = vld [vmem:[%s299 + $0x108] sm:$0xff]
        %v379 = vld [vmem:[%s299 + $0x110] sm:$0xff]
        %v380 = vld [vmem:[%s299 + $0x118] sm:$0xff]
        %v381 = vld [vmem:[%s299 + $0x120] sm:$0xff]
        %v382 = vld [vmem:[%s299 + $0x128] sm:$0xff]
        %v383 = vld [vmem:[%s299 + $0x130] sm:$0xff]
        %v384 = vld [vmem:[%s299 + $0x138] sm:$0xff]
        %v385 = vld [vmem:[%s299 + $0x140] sm:$0xff]
        %v386 = vld [vmem:[%s299 + $0x148] sm:$0xff]
        %v387 = vld [vmem:[%s299 + $0x150] sm:$0xff]
        %v388 = vld [vmem:[%s299 + $0x158] sm:$0xff]
        %v389 = vld [vmem:[%s299 + $0x160] sm:$0xff]
        %v390 = vld [vmem:[%s299 + $0x168] sm:$0xff]
        %v391 = vld [vmem:[%s299 + $0x170] sm:$0xff]
        %v392 = vld [vmem:[%s299 + $0x178] sm:$0xff]
        %v393 = vld [vmem:[%s299 + $0x180] sm:$0xff]
        %v394 = vld [vmem:[%s299 + $0x188] sm:$0xff]
        %v395 = vld [vmem:[%s299 + $0x190] sm:$0xff]
        %v396 = vld [vmem:[%s299 + $0x198] sm:$0xff]
        %v397 = vld [vmem:[%s299 + $0x1a0] sm:$0xff]
        %v398 = vld [vmem:[%s299 + $0x1a8] sm:$0xff]
        %v399 = vld [vmem:[%s299 + $0x1b0] sm:$0xff]
        %v400 = vld [vmem:[%s299 + $0x1b8] sm:$0xff]
        %v401 = vld [vmem:[%s299 + $0x1c0] sm:$0xff]
        %v402 = vld [vmem:[%s299 + $0x1c8] sm:$0xff]
        %v403 = vld [vmem:[%s299 + $0x1d0] sm:$0xff]
        %v404 = vld [vmem:[%s299 + $0x1d8] sm:$0xff]
        %v405 = vld [vmem:[%s299 + $0x1e0] sm:$0xff]
        %v406 = vld [vmem:[%s299 + $0x1e8] sm:$0xff]
        %v407 = vld [vmem:[%s299 + $0x1f0] sm:$0xff]
        %v408 = vld [vmem:[%s299 + $0x1f8] sm:$0xff]
        %v409 = vld [vmem:[#allocation5] sm:$0xf]
        %v410 = vld [vmem:[#allocation5 + $0x4] sm:$0xf]
        %v411 = vld [vmem:[#allocation5 + $0x8] sm:$0xf]
        %v412 = vld [vmem:[#allocation5 + $0xc] sm:$0xf]
        %v413 = vld [vmem:[#allocation5 + $0x10] sm:$0xf]
        %v414 = vld [vmem:[#allocation5 + $0x14] sm:$0xf]
        %v415 = vld [vmem:[#allocation5 + $0x18] sm:$0xf]
        %v416 = vld [vmem:[#allocation5 + $0x1c] sm:$0xf]
        %v417 = vld [vmem:[#allocation5 + $0x20] sm:$0xf]
        %v418 = vld [vmem:[#allocation5 + $0x24] sm:$0xf]
        %v419 = vld [vmem:[#allocation5 + $0x28] sm:$0xf]
        %v420 = vld [vmem:[#allocation5 + $0x2c] sm:$0xf]
        %v421 = vld [vmem:[#allocation5 + $0x30] sm:$0xf]
        %v422 = vld [vmem:[#allocation5 + $0x34] sm:$0xf]
        %v423 = vld [vmem:[#allocation5 + $0x38] sm:$0xf]
        %v424 = vld [vmem:[#allocation5 + $0x3c] sm:$0xf]
        %v425 = vld [vmem:[#allocation5 + $0x40] sm:$0xf]
        %v426 = vld [vmem:[#allocation5 + $0x44] sm:$0xf]
        %v427 = vld [vmem:[#allocation5 + $0x48] sm:$0xf]
        %v428 = vld [vmem:[#allocation5 + $0x4c] sm:$0xf]
        %v429 = vld [vmem:[#allocation5 + $0x50] sm:$0xf]
        %v430 = vld [vmem:[#allocation5 + $0x54] sm:$0xf]
        %v431 = vld [vmem:[#allocation5 + $0x58] sm:$0xf]
        %v432 = vld [vmem:[#allocation5 + $0x5c] sm:$0xf]
        %v433 = vld [vmem:[#allocation5 + $0x60] sm:$0xf]
        %v434 = vld [vmem:[#allocation5 + $0x64] sm:$0xf]
        %v435 = vld [vmem:[#allocation5 + $0x68] sm:$0xf]
        %v436 = vld [vmem:[#allocation5 + $0x6c] sm:$0xf]
        %v437 = vld [vmem:[#allocation5 + $0x70] sm:$0xf]
        %v438 = vld [vmem:[#allocation5 + $0x74] sm:$0xf]
        %v439 = vld [vmem:[#allocation5 + $0x78] sm:$0xf]
        %v440 = vld [vmem:[#allocation5 + $0x7c] sm:$0xf]
        %v441 = vld [vmem:[%s2] sm:$0x1]
        %v443 = vlaneseq
        %v444 = vshrl.u32 %v443, 7
        %v445 = vsub.s32 0, %v444
        %v446 = vrot.slane %v441, %v445
        %v512 = vunpack.c.l.b16 %v345
        %v513 = vunpack.c.h.b16 %v345
        %v514 = vunpack.c.l.b16 %v346
        %v515 = vunpack.c.h.b16 %v346
        %v516 = vunpack.c.l.b16 %v347
        %v517 = vunpack.c.h.b16 %v347
        %v518 = vunpack.c.l.b16 %v348
        %v519 = vunpack.c.h.b16 %v348
        %v520 = vunpack.c.l.b16 %v349
        %v521 = vunpack.c.h.b16 %v349
        %v522 = vunpack.c.l.b16 %v350
        %v523 = vunpack.c.h.b16 %v350
        %v524 = vunpack.c.l.b16 %v351
        %v525 = vunpack.c.h.b16 %v351
        %v526 = vunpack.c.l.b16 %v352
        %v527 = vunpack.c.h.b16 %v352
        %v528 = vunpack.c.l.b16 %v353
        %v529 = vunpack.c.h.b16 %v353
        %v530 = vunpack.c.l.b16 %v354
        %v531 = vunpack.c.h.b16 %v354
        %v532 = vunpack.c.l.b16 %v355
        %v533 = vunpack.c.h.b16 %v355
        %v534 = vunpack.c.l.b16 %v356
        %v535 = vunpack.c.h.b16 %v356
        %v536 = vunpack.c.l.b16 %v357
        %v537 = vunpack.c.h.b16 %v357
        %v538 = vunpack.c.l.b16 %v358
        %v539 = vunpack.c.h.b16 %v358
        %v540 = vunpack.c.l.b16 %v359
        %v541 = vunpack.c.h.b16 %v359
        %v542 = vunpack.c.l.b16 %v360
        %v543 = vunpack.c.h.b16 %v360
        %v544 = vunpack.c.l.b16 %v361
        %v545 = vunpack.c.h.b16 %v361
        %v546 = vunpack.c.l.b16 %v362
        %v547 = vunpack.c.h.b16 %v362
        %v548 = vunpack.c.l.b16 %v363
        %v549 = vunpack.c.h.b16 %v363
        %v550 = vunpack.c.l.b16 %v364
        %v551 = vunpack.c.h.b16 %v364
        %v552 = vunpack.c.l.b16 %v365
        %v553 = vunpack.c.h.b16 %v365
        %v554 = vunpack.c.l.b16 %v366
        %v555 = vunpack.c.h.b16 %v366
        %v556 = vunpack.c.l.b16 %v367
        %v557 = vunpack.c.h.b16 %v367
        %v558 = vunpack.c.l.b16 %v368
        %v559 = vunpack.c.h.b16 %v368
        %v560 = vunpack.c.l.b16 %v369
        %v561 = vunpack.c.h.b16 %v369
        %v562 = vunpack.c.l.b16 %v370
        %v563 = vunpack.c.h.b16 %v370
        %v564 = vunpack.c.l.b16 %v371
        %v565 = vunpack.c.h.b16 %v371
        %v566 = vunpack.c.l.b16 %v372
        %v567 = vunpack.c.h.b16 %v372
        %v568 = vunpack.c.l.b16 %v373
        %v569 = vunpack.c.h.b16 %v373
        %v570 = vunpack.c.l.b16 %v374
        %v571 = vunpack.c.h.b16 %v374
        %v572 = vunpack.c.l.b16 %v375
        %v573 = vunpack.c.h.b16 %v375
        %v574 = vunpack.c.l.b16 %v376
        %v575 = vunpack.c.h.b16 %v376
        %v576 = vunpack.c.l.b16 %v377
        %v577 = vunpack.c.h.b16 %v377
        %v578 = vunpack.c.l.b16 %v378
        %v579 = vunpack.c.h.b16 %v378
        %v580 = vunpack.c.l.b16 %v379
        %v581 = vunpack.c.h.b16 %v379
        %v582 = vunpack.c.l.b16 %v380
        %v583 = vunpack.c.h.b16 %v380
        %v584 = vunpack.c.l.b16 %v381
        %v585 = vunpack.c.h.b16 %v381
        %v586 = vunpack.c.l.b16 %v382
        %v587 = vunpack.c.h.b16 %v382
        %v588 = vunpack.c.l.b16 %v383
        %v589 = vunpack.c.h.b16 %v383
        %v590 = vunpack.c.l.b16 %v384
        %v591 = vunpack.c.h.b16 %v384
        %v592 = vunpack.c.l.b16 %v385
        %v593 = vunpack.c.h.b16 %v385
        %v594 = vunpack.c.l.b16 %v386
        %v595 = vunpack.c.h.b16 %v386
        %v596 = vunpack.c.l.b16 %v387
        %v597 = vunpack.c.h.b16 %v387
        %v598 = vunpack.c.l.b16 %v388
        %v599 = vunpack.c.h.b16 %v388
        %v600 = vunpack.c.l.b16 %v389
        %v601 = vunpack.c.h.b16 %v389
        %v602 = vunpack.c.l.b16 %v390
        %v603 = vunpack.c.h.b16 %v390
        %v604 = vunpack.c.l.b16 %v391
        %v605 = vunpack.c.h.b16 %v391
        %v606 = vunpack.c.l.b16 %v392
        %v607 = vunpack.c.h.b16 %v392
        %v608 = vunpack.c.l.b16 %v393
        %v609 = vunpack.c.h.b16 %v393
        %v610 = vunpack.c.l.b16 %v394
        %v611 = vunpack.c.h.b16 %v394
        %v612 = vunpack.c.l.b16 %v395
        %v613 = vunpack.c.h.b16 %v395
        %v614 = vunpack.c.l.b16 %v396
        %v615 = vunpack.c.h.b16 %v396
        %v616 = vunpack.c.l.b16 %v397
        %v617 = vunpack.c.h.b16 %v397
        %v618 = vunpack.c.l.b16 %v398
        %v619 = vunpack.c.h.b16 %v398
        %v620 = vunpack.c.l.b16 %v399
        %v621 = vunpack.c.h.b16 %v399
        %v622 = vunpack.c.l.b16 %v400
        %v623 = vunpack.c.h.b16 %v400
        %v624 = vunpack.c.l.b16 %v401
        %v625 = vunpack.c.h.b16 %v401
        %v626 = vunpack.c.l.b16 %v402
        %v627 = vunpack.c.h.b16 %v402
        %v628 = vunpack.c.l.b16 %v403
        %v629 = vunpack.c.h.b16 %v403
        %v630 = vunpack.c.l.b16 %v404
        %v631 = vunpack.c.h.b16 %v404
        %v632 = vunpack.c.l.b16 %v405
        %v633 = vunpack.c.h.b16 %v405
        %v634 = vunpack.c.l.b16 %v406
        %v635 = vunpack.c.h.b16 %v406
        %v636 = vunpack.c.l.b16 %v407
        %v637 = vunpack.c.h.b16 %v407
        %v638 = vunpack.c.l.b16 %v408
        %v639 = vunpack.c.h.b16 %v408
        %v640 = vpack.c.b16 %v514, %v512
        %v641 = vpack.c.b16 %v515, %v513
        %v642 = vpack.c.b16 %v518, %v516
        %v643 = vpack.c.b16 %v519, %v517
        %v644 = vpack.c.b16 %v522, %v520
        %v645 = vpack.c.b16 %v523, %v521
        %v646 = vpack.c.b16 %v526, %v524
        %v647 = vpack.c.b16 %v527, %v525
        %v648 = vpack.c.b16 %v530, %v528
        %v649 = vpack.c.b16 %v531, %v529
        %v650 = vpack.c.b16 %v534, %v532
        %v651 = vpack.c.b16 %v535, %v533
        %v652 = vpack.c.b16 %v538, %v536
        %v653 = vpack.c.b16 %v539, %v537
        %v654 = vpack.c.b16 %v542, %v540
        %v655 = vpack.c.b16 %v543, %v541
        %v656 = vpack.c.b16 %v546, %v544
        %v657 = vpack.c.b16 %v547, %v545
        %v658 = vpack.c.b16 %v550, %v548
        %v659 = vpack.c.b16 %v551, %v549
        %v660 = vpack.c.b16 %v554, %v552
        %v661 = vpack.c.b16 %v555, %v553
        %v662 = vpack.c.b16 %v558, %v556
        %v663 = vpack.c.b16 %v559, %v557
        %v664 = vpack.c.b16 %v562, %v560
        %v665 = vpack.c.b16 %v563, %v561
        %v666 = vpack.c.b16 %v566, %v564
        %v667 = vpack.c.b16 %v567, %v565
        %v668 = vpack.c.b16 %v570, %v568
        %v669 = vpack.c.b16 %v571, %v569
        %v670 = vpack.c.b16 %v574, %v572
        %v671 = vpack.c.b16 %v575, %v573
        %v672 = vpack.c.b16 %v578, %v576
        %v673 = vpack.c.b16 %v579, %v577
        %v674 = vpack.c.b16 %v582, %v580
        %v675 = vpack.c.b16 %v583, %v581
        %v676 = vpack.c.b16 %v586, %v584
        %v677 = vpack.c.b16 %v587, %v585
        %v678 = vpack.c.b16 %v590, %v588
        %v679 = vpack.c.b16 %v591, %v589
        %v680 = vpack.c.b16 %v594, %v592
        %v681 = vpack.c.b16 %v595, %v593
        %v682 = vpack.c.b16 %v598, %v596
        %v683 = vpack.c.b16 %v599, %v597
        %v684 = vpack.c.b16 %v602, %v600
        %v685 = vpack.c.b16 %v603, %v601
        %v686 = vpack.c.b16 %v606, %v604
        %v687 = vpack.c.b16 %v607, %v605
        %v688 = vpack.c.b16 %v610, %v608
        %v689 = vpack.c.b16 %v611, %v609
        %v690 = vpack.c.b16 %v614, %v612
        %v691 = vpack.c.b16 %v615, %v613
        %v692 = vpack.c.b16 %v618, %v616
        %v693 = vpack.c.b16 %v619, %v617
        %v694 = vpack.c.b16 %v622, %v620
        %v695 = vpack.c.b16 %v623, %v621
        %v696 = vpack.c.b16 %v626, %v624
        %v697 = vpack.c.b16 %v627, %v625
        %v698 = vpack.c.b16 %v630, %v628
        %v699 = vpack.c.b16 %v631, %v629
        %v700 = vpack.c.b16 %v634, %v632
        %v701 = vpack.c.b16 %v635, %v633
        %v702 = vpack.c.b16 %v638, %v636
        %v703 = vpack.c.b16 %v639, %v637
        %v800 = vunpack.c.l.b16 %v409
        %v801 = vunpack.c.l.b16 %v410
        %v802 = vunpack.c.l.b16 %v411
        %v803 = vunpack.c.l.b16 %v412
        %v804 = vunpack.c.l.b16 %v413
        %v805 = vunpack.c.l.b16 %v414
        %v806 = vunpack.c.l.b16 %v415
        %v807 = vunpack.c.l.b16 %v416
        %v808 = vunpack.c.l.b16 %v417
        %v809 = vunpack.c.l.b16 %v418
        %v810 = vunpack.c.l.b16 %v419
        %v811 = vunpack.c.l.b16 %v420
        %v812 = vunpack.c.l.b16 %v421
        %v813 = vunpack.c.l.b16 %v422
        %v814 = vunpack.c.l.b16 %v423
        %v815 = vunpack.c.l.b16 %v424
        %v816 = vunpack.c.l.b16 %v425
        %v817 = vunpack.c.l.b16 %v426
        %v818 = vunpack.c.l.b16 %v427
        %v819 = vunpack.c.l.b16 %v428
        %v820 = vunpack.c.l.b16 %v429
        %v821 = vunpack.c.l.b16 %v430
        %v822 = vunpack.c.l.b16 %v431
        %v823 = vunpack.c.l.b16 %v432
        %v824 = vunpack.c.l.b16 %v433
        %v825 = vunpack.c.l.b16 %v434
        %v826 = vunpack.c.l.b16 %v435
        %v827 = vunpack.c.l.b16 %v436
        %v828 = vunpack.c.l.b16 %v437
        %v829 = vunpack.c.l.b16 %v438
        %v830 = vunpack.c.l.b16 %v439
        %v831 = vunpack.c.l.b16 %v440
        %v832 = vpack.c.b16 %v801, %v800
        %v833 = vpack.c.b16 %v803, %v802
        %v834 = vpack.c.b16 %v805, %v804
        %v835 = vpack.c.b16 %v807, %v806
        %v836 = vpack.c.b16 %v809, %v808
        %v837 = vpack.c.b16 %v811, %v810
        %v838 = vpack.c.b16 %v813, %v812
        %v839 = vpack.c.b16 %v815, %v814
        %v840 = vpack.c.b16 %v817, %v816
        %v841 = vpack.c.b16 %v819, %v818
        %v842 = vpack.c.b16 %v821, %v820
        %v843 = vpack.c.b16 %v823, %v822
        %v844 = vpack.c.b16 %v825, %v824
        %v845 = vpack.c.b16 %v827, %v826
        %v846 = vpack.c.b16 %v829, %v828
        %v847 = vpack.c.b16 %v831, %v830
        %864 = vmatprep.subr.bf16.mxu0 0
        %865 = vmatpush1.bf16.msra.mxu0 %v832
        %866 = vmatprep.subr.bf16.mxu0 0
        %867 = vmatpush1.bf16.msra.mxu0 %v833
        %868 = vmatprep.subr.bf16.mxu0 0
        %869 = vmatpush1.bf16.msra.mxu0 %v834
        %870 = vmatprep.subr.bf16.mxu0 0
        %871 = vmatpush1.bf16.msra.mxu0 %v835
        %872 = vmatprep.subr.bf16.mxu0 0
        %873 = vmatpush1.bf16.msra.mxu0 %v836
        %874 = vmatprep.subr.bf16.mxu0 0
        %875 = vmatpush1.bf16.msra.mxu0 %v837
        %876 = vmatprep.subr.bf16.mxu0 0
        %877 = vmatpush1.bf16.msra.mxu0 %v838
        %878 = vmatprep.subr.bf16.mxu0 0
        %879 = vmatpush1.bf16.msra.mxu0 %v839
        %880 = vmatprep.subr.bf16.mxu0 0
        %881 = vmatpush1.bf16.msra.mxu0 %v840
        %882 = vmatprep.subr.bf16.mxu0 0
        %883 = vmatpush1.bf16.msra.mxu0 %v841
        %884 = vmatprep.subr.bf16.mxu0 0
        %885 = vmatpush1.bf16.msra.mxu0 %v842
        %886 = vmatprep.subr.bf16.mxu0 0
        %887 = vmatpush1.bf16.msra.mxu0 %v843
        %888 = vmatprep.subr.bf16.mxu0 0
        %889 = vmatpush1.bf16.msra.mxu0 %v844
        %890 = vmatprep.subr.bf16.mxu0 0
        %891 = vmatpush1.bf16.msra.mxu0 %v845
        %892 = vmatprep.subr.bf16.mxu0 0
        %893 = vmatpush1.bf16.msra.mxu0 %v846
        %894 = vmatprep.subr.bf16.mxu0 0
        %895 = vmatpush1.bf16.msra.mxu0 %v847
        %896 = vmatprep.mubr.bf16.mxu0 %v641
        %897 = vmatmul.mubr.bf16.gmra.mrb[0].mxu0 %v640
        %v898 = vpop.f32.mrb[0].mxu0
        %v899 = vadd.f32 %v446, %v898
        %v900 = vpop.f32.mrb[0].mxu0
        %v901 = vpop.f32.mrb[0].mxu0
        %v902 = vadd.f32 %v446, %v901
        %v903 = vpop.f32.mrb[0].mxu0
        %904 = vmatprep.mubr.bf16.mxu0 %v643
        %905 = vmatmul.mubr.bf16.gmra.mrb[0].mxu0 %v642
        %v906 = vpop.f32.mrb[0].mxu0
        %v907 = vadd.f32 %v446, %v906
        %v908 = vpop.f32.mrb[0].mxu0
        %v909 = vpop.f32.mrb[0].mxu0
        %v910 = vadd.f32 %v446, %v909
        %v911 = vpop.f32.mrb[0].mxu0
        %912 = vmatprep.mubr.bf16.mxu0 %v645
        %913 = vmatmul.mubr.bf16.gmra.mrb[0].mxu0 %v644
        %v914 = vpop.f32.mrb[0].mxu0
        %v915 = vadd.f32 %v446, %v914
        %v916 = vpop.f32.mrb[0].mxu0
        %v917 = vpop.f32.mrb[0].mxu0
        %v918 = vadd.f32 %v446, %v917
        %v919 = vpop.f32.mrb[0].mxu0
        %920 = vmatprep.mubr.bf16.mxu0 %v647
        %921 = vmatmul.mubr.bf16.gmra.mrb[0].mxu0 %v646
        %v922 = vpop.f32.mrb[0].mxu0
        %v923 = vadd.f32 %v446, %v922
        %v924 = vpop.f32.mrb[0].mxu0
        %v925 = vpop.f32.mrb[0].mxu0
        %v926 = vadd.f32 %v446, %v925
        %v927 = vpop.f32.mrb[0].mxu0
        %928 = vmatprep.mubr.bf16.mxu0 %v649
        %929 = vmatmul.mubr.bf16.gmra.mrb[0].mxu0 %v648
        %v930 = vpop.f32.mrb[0].mxu0
        %v931 = vadd.f32 %v446, %v930
        %v932 = vpop.f32.mrb[0].mxu0
        %v933 = vpop.f32.mrb[0].mxu0
        %v934 = vadd.f32 %v446, %v933
        %v935 = vpop.f32.mrb[0].mxu0
        %936 = vmatprep.mubr.bf16.mxu0 %v651
        %937 = vmatmul.mubr.bf16.gmra.mrb[0].mxu0 %v650
        %v938 = vpop.f32.mrb[0].mxu0
        %v939 = vadd.f32 %v446, %v938
        %v940 = vpop.f32.mrb[0].mxu0
        %v941 = vpop.f32.mrb[0].mxu0
        %v942 = vadd.f32 %v446, %v941
        %v943 = vpop.f32.mrb[0].mxu0
        %944 = vmatprep.mubr.bf16.mxu0 %v653
        %945 = vmatmul.mubr.bf16.gmra.mrb[0].mxu0 %v652
        %v946 = vpop.f32.mrb[0].mxu0
        %v947 = vadd.f32 %v446, %v946
        %v948 = vpop.f32.mrb[0].mxu0
        %v949 = vpop.f32.mrb[0].mxu0
        %v950 = vadd.f32 %v446, %v949
        %v951 = vpop.f32.mrb[0].mxu0
        %952 = vmatprep.mubr.bf16.mxu0 %v655
        %953 = vmatmul.mubr.bf16.gmra.mrb[0].mxu0 %v654
        %v954 = vpop.f32.mrb[0].mxu0
        %v955 = vadd.f32 %v446, %v954
        %v956 = vpop.f32.mrb[0].mxu0
        %v957 = vpop.f32.mrb[0].mxu0
        %v958 = vadd.f32 %v446, %v957
        %v959 = vpop.f32.mrb[0].mxu0
        %960 = vmatprep.mubr.bf16.mxu0 %v657
        %961 = vmatmul.mubr.bf16.gmra.mrb[0].mxu0 %v656
        %v962 = vpop.f32.mrb[0].mxu0
        %v963 = vadd.f32 %v446, %v962
        %v964 = vpop.f32.mrb[0].mxu0
        %v965 = vpop.f32.mrb[0].mxu0
        %v966 = vadd.f32 %v446, %v965
        %v967 = vpop.f32.mrb[0].mxu0
        %968 = vmatprep.mubr.bf16.mxu0 %v659
        %969 = vmatmul.mubr.bf16.gmra.mrb[0].mxu0 %v658
        %v970 = vpop.f32.mrb[0].mxu0
        %v971 = vadd.f32 %v446, %v970
        %v972 = vpop.f32.mrb[0].mxu0
        %v973 = vpop.f32.mrb[0].mxu0
        %v974 = vadd.f32 %v446, %v973
        %v975 = vpop.f32.mrb[0].mxu0
        %976 = vmatprep.mubr.bf16.mxu0 %v661
        %977 = vmatmul.mubr.bf16.gmra.mrb[0].mxu0 %v660
        %v978 = vpop.f32.mrb[0].mxu0
        %v979 = vadd.f32 %v446, %v978
        %v980 = vpop.f32.mrb[0].mxu0
        %v981 = vpop.f32.mrb[0].mxu0
        %v982 = vadd.f32 %v446, %v981
        %v983 = vpop.f32.mrb[0].mxu0
        %984 = vmatprep.mubr.bf16.mxu0 %v663
        %985 = vmatmul.mubr.bf16.gmra.mrb[0].mxu0 %v662
        %v986 = vpop.f32.mrb[0].mxu0
        %v987 = vadd.f32 %v446, %v986
        %v988 = vpop.f32.mrb[0].mxu0
        %v989 = vpop.f32.mrb[0].mxu0
        %v990 = vadd.f32 %v446, %v989
        %v991 = vpop.f32.mrb[0].mxu0
        %992 = vmatprep.mubr.bf16.mxu0 %v665
        %993 = vmatmul.mubr.bf16.gmra.mrb[0].mxu0 %v664
        %v994 = vpop.f32.mrb[0].mxu0
        %v995 = vadd.f32 %v446, %v994
        %v996 = vpop.f32.mrb[0].mxu0
        %v997 = vpop.f32.mrb[0].mxu0
        %v998 = vadd.f32 %v446, %v997
        %v999 = vpop.f32.mrb[0].mxu0
        %1000 = vmatprep.mubr.bf16.mxu0 %v667
        %1001 = vmatmul.mubr.bf16.gmra.mrb[0].mxu0 %v666
        %v1002 = vpop.f32.mrb[0].mxu0
        %v1003 = vadd.f32 %v446, %v1002
        %v1004 = vpop.f32.mrb[0].mxu0
        %v1005 = vpop.f32.mrb[0].mxu0
        %v1006 = vadd.f32 %v446, %v1005
        %v1007 = vpop.f32.mrb[0].mxu0
        %1008 = vmatprep.mubr.bf16.mxu0 %v669
        %1009 = vmatmul.mubr.bf16.gmra.mrb[0].mxu0 %v668
        %v1010 = vpop.f32.mrb[0].mxu0
        %v1011 = vadd.f32 %v446, %v1010
        %v1012 = vpop.f32.mrb[0].mxu0
        %v1013 = vpop.f32.mrb[0].mxu0
        %v1014 = vadd.f32 %v446, %v1013
        %v1015 = vpop.f32.mrb[0].mxu0
        %1016 = vmatprep.mubr.bf16.mxu0 %v671
        %1017 = vmatmul.mubr.bf16.gmra.mrb[0].mxu0 %v670
        %v1018 = vpop.f32.mrb[0].mxu0
        %v1019 = vadd.f32 %v446, %v1018
        %v1020 = vpop.f32.mrb[0].mxu0
        %v1021 = vpop.f32.mrb[0].mxu0
        %v1022 = vadd.f32 %v446, %v1021
        %v1023 = vpop.f32.mrb[0].mxu0
        %1024 = vmatprep.mubr.bf16.mxu0 %v673
        %1025 = vmatmul.mubr.bf16.gmra.mrb[0].mxu0 %v672
        %v1026 = vpop.f32.mrb[0].mxu0
        %v1027 = vadd.f32 %v446, %v1026
        %v1028 = vpop.f32.mrb[0].mxu0
        %v1029 = vpop.f32.mrb[0].mxu0
        %v1030 = vadd.f32 %v446, %v1029
        %v1031 = vpop.f32.mrb[0].mxu0
        %1032 = vmatprep.mubr.bf16.mxu0 %v675
        %1033 = vmatmul.mubr.bf16.gmra.mrb[0].mxu0 %v674
        %v1034 = vpop.f32.mrb[0].mxu0
        %v1035 = vadd.f32 %v446, %v1034
        %v1036 = vpop.f32.mrb[0].mxu0
        %v1037 = vpop.f32.mrb[0].mxu0
        %v1038 = vadd.f32 %v446, %v1037
        %v1039 = vpop.f32.mrb[0].mxu0
        %1040 = vmatprep.mubr.bf16.mxu0 %v677
        %1041 = vmatmul.mubr.bf16.gmra.mrb[0].mxu0 %v676
        %v1042 = vpop.f32.mrb[0].mxu0
        %v1043 = vadd.f32 %v446, %v1042
        %v1044 = vpop.f32.mrb[0].mxu0
        %v1045 = vpop.f32.mrb[0].mxu0
        %v1046 = vadd.f32 %v446, %v1045
        %v1047 = vpop.f32.mrb[0].mxu0
        %1048 = vmatprep.mubr.bf16.mxu0 %v679
        %1049 = vmatmul.mubr.bf16.gmra.mrb[0].mxu0 %v678
        %v1050 = vpop.f32.mrb[0].mxu0
        %v1051 = vadd.f32 %v446, %v1050
        %v1052 = vpop.f32.mrb[0].mxu0
        %v1053 = vpop.f32.mrb[0].mxu0
        %v1054 = vadd.f32 %v446, %v1053
        %v1055 = vpop.f32.mrb[0].mxu0
        %1056 = vmatprep.mubr.bf16.mxu0 %v681
        %1057 = vmatmul.mubr.bf16.gmra.mrb[0].mxu0 %v680
        %v1058 = vpop.f32.mrb[0].mxu0
        %v1059 = vadd.f32 %v446, %v1058
        %v1060 = vpop.f32.mrb[0].mxu0
        %v1061 = vpop.f32.mrb[0].mxu0
        %v1062 = vadd.f32 %v446, %v1061
        %v1063 = vpop.f32.mrb[0].mxu0
        %1064 = vmatprep.mubr.bf16.mxu0 %v683
        %1065 = vmatmul.mubr.bf16.gmra.mrb[0].mxu0 %v682
        %v1066 = vpop.f32.mrb[0].mxu0
        %v1067 = vadd.f32 %v446, %v1066
        %v1068 = vpop.f32.mrb[0].mxu0
        %v1069 = vpop.f32.mrb[0].mxu0
        %v1070 = vadd.f32 %v446, %v1069
        %v1071 = vpop.f32.mrb[0].mxu0
        %1072 = vmatprep.mubr.bf16.mxu0 %v685
        %1073 = vmatmul.mubr.bf16.gmra.mrb[0].mxu0 %v684
        %v1074 = vpop.f32.mrb[0].mxu0
        %v1075 = vadd.f32 %v446, %v1074
        %v1076 = vpop.f32.mrb[0].mxu0
        %v1077 = vpop.f32.mrb[0].mxu0
        %v1078 = vadd.f32 %v446, %v1077
        %v1079 = vpop.f32.mrb[0].mxu0
        %1080 = vmatprep.mubr.bf16.mxu0 %v687
        %1081 = vmatmul.mubr.bf16.gmra.mrb[0].mxu0 %v686
        %v1082 = vpop.f32.mrb[0].mxu0
        %v1083 = vadd.f32 %v446, %v1082
        %v1084 = vpop.f32.mrb[0].mxu0
        %v1085 = vpop.f32.mrb[0].mxu0
        %v1086 = vadd.f32 %v446, %v1085
        %v1087 = vpop.f32.mrb[0].mxu0
        %1088 = vmatprep.mubr.bf16.mxu0 %v689
        %1089 = vmatmul.mubr.bf16.gmra.mrb[0].mxu0 %v688
        %v1090 = vpop.f32.mrb[0].mxu0
        %v1091 = vadd.f32 %v446, %v1090
        %v1092 = vpop.f32.mrb[0].mxu0
        %v1093 = vpop.f32.mrb[0].mxu0
        %v1094 = vadd.f32 %v446, %v1093
        %v1095 = vpop.f32.mrb[0].mxu0
        %1096 = vmatprep.mubr.bf16.mxu0 %v691
        %1097 = vmatmul.mubr.bf16.gmra.mrb[0].mxu0 %v690
        %v1098 = vpop.f32.mrb[0].mxu0
        %v1099 = vadd.f32 %v446, %v1098
        %v1100 = vpop.f32.mrb[0].mxu0
        %v1101 = vpop.f32.mrb[0].mxu0
        %v1102 = vadd.f32 %v446, %v1101
        %v1103 = vpop.f32.mrb[0].mxu0
        %1104 = vmatprep.mubr.bf16.mxu0 %v693
        %1105 = vmatmul.mubr.bf16.gmra.mrb[0].mxu0 %v692
        %v1106 = vpop.f32.mrb[0].mxu0
        %v1107 = vadd.f32 %v446, %v1106
        %v1108 = vpop.f32.mrb[0].mxu0
        %v1109 = vpop.f32.mrb[0].mxu0
        %v1110 = vadd.f32 %v446, %v1109
        %v1111 = vpop.f32.mrb[0].mxu0
        %1112 = vmatprep.mubr.bf16.mxu0 %v695
        %1113 = vmatmul.mubr.bf16.gmra.mrb[0].mxu0 %v694
        %v1114 = vpop.f32.mrb[0].mxu0
        %v1115 = vadd.f32 %v446, %v1114
        %v1116 = vpop.f32.mrb[0].mxu0
        %v1117 = vpop.f32.mrb[0].mxu0
        %v1118 = vadd.f32 %v446, %v1117
        %v1119 = vpop.f32.mrb[0].mxu0
        %1120 = vmatprep.mubr.bf16.mxu0 %v697
        %1121 = vmatmul.mubr.bf16.gmra.mrb[0].mxu0 %v696
        %v1122 = vpop.f32.mrb[0].mxu0
        %v1123 = vadd.f32 %v446, %v1122
        %v1124 = vpop.f32.mrb[0].mxu0
        %v1125 = vpop.f32.mrb[0].mxu0
        %v1126 = vadd.f32 %v446, %v1125
        %v1127 = vpop.f32.mrb[0].mxu0
        %1128 = vmatprep.mubr.bf16.mxu0 %v699
        %1129 = vmatmul.mubr.bf16.gmra.mrb[0].mxu0 %v698
        %v1130 = vpop.f32.mrb[0].mxu0
        %v1131 = vadd.f32 %v446, %v1130
        %v1132 = vpop.f32.mrb[0].mxu0
        %v1133 = vpop.f32.mrb[0].mxu0
        %v1134 = vadd.f32 %v446, %v1133
        %v1135 = vpop.f32.mrb[0].mxu0
        %1136 = vmatprep.mubr.bf16.mxu0 %v701
        %1137 = vmatmul.mubr.bf16.gmra.mrb[0].mxu0 %v700
        %v1138 = vpop.f32.mrb[0].mxu0
        %v1139 = vadd.f32 %v446, %v1138
        %v1140 = vpop.f32.mrb[0].mxu0
        %v1141 = vpop.f32.mrb[0].mxu0
        %v1142 = vadd.f32 %v446, %v1141
        %v1143 = vpop.f32.mrb[0].mxu0
        %1144 = vmatprep.mubr.bf16.mxu0 %v703
        %1145 = vmatmul.mubr.bf16.gmra.mrb[0].mxu0 %v702
        %v1146 = vpop.f32.mrb[0].mxu0
        %v1147 = vadd.f32 %v446, %v1146
        %v1148 = vpop.f32.mrb[0].mxu0
        %v1149 = vpop.f32.mrb[0].mxu0
        %v1150 = vadd.f32 %v446, %v1149
        %v1151 = vpop.f32.mrb[0].mxu0
        %1152 = vdwg.mxu0
        %v1153 = vmax.f32 %v899, 0.0
        %v1154 = vmax.f32 %v902, 0.0
        %v1155 = vmax.f32 %v907, 0.0
        %v1156 = vmax.f32 %v910, 0.0
        %v1157 = vmax.f32 %v915, 0.0
        %v1158 = vmax.f32 %v918, 0.0
        %v1159 = vmax.f32 %v923, 0.0
        %v1160 = vmax.f32 %v926, 0.0
        %v1161 = vmax.f32 %v931, 0.0
        %v1162 = vmax.f32 %v934, 0.0
        %v1163 = vmax.f32 %v939, 0.0
        %v1164 = vmax.f32 %v942, 0.0
        %v1165 = vmax.f32 %v947, 0.0
        %v1166 = vmax.f32 %v950, 0.0
        %v1167 = vmax.f32 %v955, 0.0
        %v1168 = vmax.f32 %v958, 0.0
        %v1169 = vmax.f32 %v963, 0.0
        %v1170 = vmax.f32 %v966, 0.0
        %v1171 = vmax.f32 %v971, 0.0
        %v1172 = vmax.f32 %v974, 0.0
        %v1173 = vmax.f32 %v979, 0.0
        %v1174 = vmax.f32 %v982, 0.0
        %v1175 = vmax.f32 %v987, 0.0
        %v1176 = vmax.f32 %v990, 0.0
        %v1177 = vmax.f32 %v995, 0.0
        %v1178 = vmax.f32 %v998, 0.0
        %v1179 = vmax.f32 %v1003, 0.0
        %v1180 = vmax.f32 %v1006, 0.0
        %v1181 = vmax.f32 %v1011, 0.0
        %v1182 = vmax.f32 %v1014, 0.0
        %v1183 = vmax.f32 %v1019, 0.0
        %v1184 = vmax.f32 %v1022, 0.0
        %v1185 = vmax.f32 %v1027, 0.0
        %v1186 = vmax.f32 %v1030, 0.0
        %v1187 = vmax.f32 %v1035, 0.0
        %v1188 = vmax.f32 %v1038, 0.0
        %v1189 = vmax.f32 %v1043, 0.0
        %v1190 = vmax.f32 %v1046, 0.0
        %v1191 = vmax.f32 %v1051, 0.0
        %v1192 = vmax.f32 %v1054, 0.0
        %v1193 = vmax.f32 %v1059, 0.0
        %v1194 = vmax.f32 %v1062, 0.0
        %v1195 = vmax.f32 %v1067, 0.0
        %v1196 = vmax.f32 %v1070, 0.0
        %v1197 = vmax.f32 %v1075, 0.0
        %v1198 = vmax.f32 %v1078, 0.0
        %v1199 = vmax.f32 %v1083, 0.0
        %v1200 = vmax.f32 %v1086, 0.0
        %v1201 = vmax.f32 %v1091, 0.0
        %v1202 = vmax.f32 %v1094, 0.0
        %v1203 = vmax.f32 %v1099, 0.0
        %v1204 = vmax.f32 %v1102, 0.0
        %v1205 = vmax.f32 %v1107, 0.0
        %v1206 = vmax.f32 %v1110, 0.0
        %v1207 = vmax.f32 %v1115, 0.0
        %v1208 = vmax.f32 %v1118, 0.0
        %v1209 = vmax.f32 %v1123, 0.0
        %v1210 = vmax.f32 %v1126, 0.0
        %v1211 = vmax.f32 %v1131, 0.0
        %v1212 = vmax.f32 %v1134, 0.0
        %v1213 = vmax.f32 %v1139, 0.0
        %v1214 = vmax.f32 %v1142, 0.0
        %v1215 = vmax.f32 %v1147, 0.0
        %v1216 = vmax.f32 %v1150, 0.0
        %v1217 = vpack.c.bf16 %v1154, %v1153
        %v1218 = vpack.c.bf16 %v1156, %v1155
        %v1219 = vpack.c.bf16 %v1158, %v1157
        %v1220 = vpack.c.bf16 %v1160, %v1159
        %v1221 = vpack.c.bf16 %v1162, %v1161
        %v1222 = vpack.c.bf16 %v1164, %v1163
        %v1223 = vpack.c.bf16 %v1166, %v1165
        %v1224 = vpack.c.bf16 %v1168, %v1167
        %v1225 = vpack.c.bf16 %v1170, %v1169
        %v1226 = vpack.c.bf16 %v1172, %v1171
        %v1227 = vpack.c.bf16 %v1174, %v1173
        %v1228 = vpack.c.bf16 %v1176, %v1175
        %v1229 = vpack.c.bf16 %v1178, %v1177
        %v1230 = vpack.c.bf16 %v1180, %v1179
        %v1231 = vpack.c.bf16 %v1182, %v1181
        %v1232 = vpack.c.bf16 %v1184, %v1183
        %v1233 = vpack.c.bf16 %v1186, %v1185
        %v1234 = vpack.c.bf16 %v1188, %v1187
        %v1235 = vpack.c.bf16 %v1190, %v1189
        %v1236 = vpack.c.bf16 %v1192, %v1191
        %v1237 = vpack.c.bf16 %v1194, %v1193
        %v1238 = vpack.c.bf16 %v1196, %v1195
        %v1239 = vpack.c.bf16 %v1198, %v1197
        %v1240 = vpack.c.bf16 %v1200, %v1199
        %v1241 = vpack.c.bf16 %v1202, %v1201
        %v1242 = vpack.c.bf16 %v1204, %v1203
        %v1243 = vpack.c.bf16 %v1206, %v1205
        %v1244 = vpack.c.bf16 %v1208, %v1207
        %v1245 = vpack.c.bf16 %v1210, %v1209
        %v1246 = vpack.c.bf16 %v1212, %v1211
        %v1247 = vpack.c.bf16 %v1214, %v1213
        %v1248 = vpack.c.bf16 %v1216, %v1215
        %v1249 = vld [vmem:[#allocation7] sm:$0xf]
        %v1250 = vld [vmem:[#allocation7 + $0x4] sm:$0xf]
        %v1251 = vld [vmem:[#allocation7 + $0x8] sm:$0xf]
        %v1252 = vld [vmem:[#allocation7 + $0xc] sm:$0xf]
        %v1253 = vld [vmem:[#allocation7 + $0x10] sm:$0xf]
        %v1254 = vld [vmem:[#allocation7 + $0x14] sm:$0xf]
        %v1255 = vld [vmem:[#allocation7 + $0x18] sm:$0xf]
        %v1256 = vld [vmem:[#allocation7 + $0x1c] sm:$0xf]
        %v1257 = vld [vmem:[#allocation7 + $0x20] sm:$0xf]
        %v1258 = vld [vmem:[#allocation7 + $0x24] sm:$0xf]
        %v1259 = vld [vmem:[#allocation7 + $0x28] sm:$0xf]
        %v1260 = vld [vmem:[#allocation7 + $0x2c] sm:$0xf]
        %v1261 = vld [vmem:[#allocation7 + $0x30] sm:$0xf]
        %v1262 = vld [vmem:[#allocation7 + $0x34] sm:$0xf]
        %v1263 = vld [vmem:[#allocation7 + $0x38] sm:$0xf]
        %v1264 = vld [vmem:[#allocation7 + $0x3c] sm:$0xf]
        %v1265 = vld [vmem:[%s4] sm:$0x1]
        %v1267 = vlaneseq
        %v1268 = vshrl.u32 %v1267, 7
        %v1269 = vsub.s32 0, %v1268
        %v1270 = vrot.slane %v1265, %v1269
        %v1288 = vunpack.c.l.b16 %v1249
        %v1289 = vunpack.c.l.b16 %v1250
        %v1290 = vunpack.c.l.b16 %v1251
        %v1291 = vunpack.c.l.b16 %v1252
        %v1292 = vunpack.c.l.b16 %v1253
        %v1293 = vunpack.c.l.b16 %v1254
        %v1294 = vunpack.c.l.b16 %v1255
        %v1295 = vunpack.c.l.b16 %v1256
        %v1296 = vunpack.c.l.b16 %v1257
        %v1297 = vunpack.c.l.b16 %v1258
        %v1298 = vunpack.c.l.b16 %v1259
        %v1299 = vunpack.c.l.b16 %v1260
        %v1300 = vunpack.c.l.b16 %v1261
        %v1301 = vunpack.c.l.b16 %v1262
        %v1302 = vunpack.c.l.b16 %v1263
        %v1303 = vunpack.c.l.b16 %v1264
        %v1304 = vpack.c.b16 %v1289, %v1288
        %v1305 = vpack.c.b16 %v1291, %v1290
        %v1306 = vpack.c.b16 %v1293, %v1292
        %v1307 = vpack.c.b16 %v1295, %v1294
        %v1308 = vpack.c.b16 %v1297, %v1296
        %v1309 = vpack.c.b16 %v1299, %v1298
        %v1310 = vpack.c.b16 %v1301, %v1300
        %v1311 = vpack.c.b16 %v1303, %v1302
        %1320 = vmatprep.subr.bf16.mxu0 0
        %1321 = vmatpush1.bf16.msra.mxu0 %v1304
        %1322 = vmatprep.subr.bf16.mxu0 0
        %1323 = vmatpush1.bf16.msra.mxu0 %v1305
        %1324 = vmatprep.subr.bf16.mxu0 0
        %1325 = vmatpush1.bf16.msra.mxu0 %v1306
        %1326 = vmatprep.subr.bf16.mxu0 0
        %1327 = vmatpush1.bf16.msra.mxu0 %v1307
        %1328 = vmatprep.subr.bf16.mxu0 0
        %1329 = vmatpush1.bf16.msra.mxu0 %v1308
        %1330 = vmatprep.subr.bf16.mxu0 0
        %1331 = vmatpush1.bf16.msra.mxu0 %v1309
        %1332 = vmatprep.subr.bf16.mxu0 0
        %1333 = vmatpush1.bf16.msra.mxu0 %v1310
        %1334 = vmatprep.subr.bf16.mxu0 0
        %1335 = vmatpush1.bf16.msra.mxu0 %v1311
        %1336 = vmatprep.subr.bf16.mxu0 0
        %1337 = vmatpush1.bf16.msra.mxu0 0
        %1338 = vmatprep.subr.bf16.mxu0 0
        %1339 = vmatpush1.bf16.msra.mxu0 0
        %1340 = vmatprep.subr.bf16.mxu0 0
        %1341 = vmatpush1.bf16.msra.mxu0 0
        %1342 = vmatprep.subr.bf16.mxu0 0
        %1343 = vmatpush1.bf16.msra.mxu0 0
        %1344 = vmatprep.subr.bf16.mxu0 0
        %1345 = vmatpush1.bf16.msra.mxu0 0
        %1346 = vmatprep.subr.bf16.mxu0 0
        %1347 = vmatpush1.bf16.msra.mxu0 0
        %1348 = vmatprep.subr.bf16.mxu0 0
        %1349 = vmatpush1.bf16.msra.mxu0 0
        %1350 = vmatprep.subr.bf16.mxu0 0
        %1351 = vmatpush1.bf16.msra.mxu0 0
        %1352 = vmatprep.mubr.bf16.mxu0 0
        %1353 = vmatmul.mubr.bf16.gmra.mrb[0].mxu0 %v1217
        %v1354 = vpop.f32.mrb[0].mxu0
        %v1355 = vadd.f32 %v1270, %v1354
        %v1356 = vpop.f32.mrb[0].mxu0
        %v1357 = vpop.f32.mrb[0].mxu0
        %v1358 = vadd.f32 %v1270, %v1357
        %v1359 = vpop.f32.mrb[0].mxu0
        %1360 = vmatprep.mubr.bf16.mxu0 0
        %1361 = vmatmul.mubr.bf16.gmra.mrb[0].mxu0 %v1218
        %v1362 = vpop.f32.mrb[0].mxu0
        %v1363 = vadd.f32 %v1270, %v1362
        %v1364 = vpop.f32.mrb[0].mxu0
        %v1365 = vpop.f32.mrb[0].mxu0
        %v1366 = vadd.f32 %v1270, %v1365
        %v1367 = vpop.f32.mrb[0].mxu0
        %1368 = vmatprep.mubr.bf16.mxu0 0
        %1369 = vmatmul.mubr.bf16.gmra.mrb[0].mxu0 %v1219
        %v1370 = vpop.f32.mrb[0].mxu0
        %v1371 = vadd.f32 %v1270, %v1370
        %v1372 = vpop.f32.mrb[0].mxu0
        %v1373 = vpop.f32.mrb[0].mxu0
        %v1374 = vadd.f32 %v1270, %v1373
        %v1375 = vpop.f32.mrb[0].mxu0
        %1376 = vmatprep.mubr.bf16.mxu0 0
        %1377 = vmatmul.mubr.bf16.gmra.mrb[0].mxu0 %v1220
        %v1378 = vpop.f32.mrb[0].mxu0
        %v1379 = vadd.f32 %v1270, %v1378
        %v1380 = vpop.f32.mrb[0].mxu0
        %v1381 = vpop.f32.mrb[0].mxu0
        %v1382 = vadd.f32 %v1270, %v1381
        %v1383 = vpop.f32.mrb[0].mxu0
        %1384 = vmatprep.mubr.bf16.mxu0 0
        %1385 = vmatmul.mubr.bf16.gmra.mrb[0].mxu0 %v1221
        %v1386 = vpop.f32.mrb[0].mxu0
        %v1387 = vadd.f32 %v1270, %v1386
        %v1388 = vpop.f32.mrb[0].mxu0
        %v1389 = vpop.f32.mrb[0].mxu0
        %v1390 = vadd.f32 %v1270, %v1389
        %v1391 = vpop.f32.mrb[0].mxu0
        %1392 = vmatprep.mubr.bf16.mxu0 0
        %1393 = vmatmul.mubr.bf16.gmra.mrb[0].mxu0 %v1222
        %v1394 = vpop.f32.mrb[0].mxu0
        %v1395 = vadd.f32 %v1270, %v1394
        %v1396 = vpop.f32.mrb[0].mxu0
        %v1397 = vpop.f32.mrb[0].mxu0
        %v1398 = vadd.f32 %v1270, %v1397
        %v1399 = vpop.f32.mrb[0].mxu0
        %1400 = vmatprep.mubr.bf16.mxu0 0
        %1401 = vmatmul.mubr.bf16.gmra.mrb[0].mxu0 %v1223
        %v1402 = vpop.f32.mrb[0].mxu0
        %v1403 = vadd.f32 %v1270, %v1402
        %v1404 = vpop.f32.mrb[0].mxu0
        %v1405 = vpop.f32.mrb[0].mxu0
        %v1406 = vadd.f32 %v1270, %v1405
        %v1407 = vpop.f32.mrb[0].mxu0
        %1408 = vmatprep.mubr.bf16.mxu0 0
        %1409 = vmatmul.mubr.bf16.gmra.mrb[0].mxu0 %v1224
        %v1410 = vpop.f32.mrb[0].mxu0
        %v1411 = vadd.f32 %v1270, %v1410
        %v1412 = vpop.f32.mrb[0].mxu0
        %v1413 = vpop.f32.mrb[0].mxu0
        %v1414 = vadd.f32 %v1270, %v1413
        %v1415 = vpop.f32.mrb[0].mxu0
        %1416 = vmatprep.mubr.bf16.mxu0 0
        %1417 = vmatmul.mubr.bf16.gmra.mrb[0].mxu0 %v1225
        %v1418 = vpop.f32.mrb[0].mxu0
        %v1419 = vadd.f32 %v1270, %v1418
        %v1420 = vpop.f32.mrb[0].mxu0
        %v1421 = vpop.f32.mrb[0].mxu0
        %v1422 = vadd.f32 %v1270, %v1421
        %v1423 = vpop.f32.mrb[0].mxu0
        %1424 = vmatprep.mubr.bf16.mxu0 0
        %1425 = vmatmul.mubr.bf16.gmra.mrb[0].mxu0 %v1226
        %v1426 = vpop.f32.mrb[0].mxu0
        %v1427 = vadd.f32 %v1270, %v1426
        %v1428 = vpop.f32.mrb[0].mxu0
        %v1429 = vpop.f32.mrb[0].mxu0
        %v1430 = vadd.f32 %v1270, %v1429
        %v1431 = vpop.f32.mrb[0].mxu0
        %1432 = vmatprep.mubr.bf16.mxu0 0
        %1433 = vmatmul.mubr.bf16.gmra.mrb[0].mxu0 %v1227
        %v1434 = vpop.f32.mrb[0].mxu0
        %v1435 = vadd.f32 %v1270, %v1434
        %v1436 = vpop.f32.mrb[0].mxu0
        %v1437 = vpop.f32.mrb[0].mxu0
        %v1438 = vadd.f32 %v1270, %v1437
        %v1439 = vpop.f32.mrb[0].mxu0
        %1440 = vmatprep.mubr.bf16.mxu0 0
        %1441 = vmatmul.mubr.bf16.gmra.mrb[0].mxu0 %v1228
        %v1442 = vpop.f32.mrb[0].mxu0
        %v1443 = vadd.f32 %v1270, %v1442
        %v1444 = vpop.f32.mrb[0].mxu0
        %v1445 = vpop.f32.mrb[0].mxu0
        %v1446 = vadd.f32 %v1270, %v1445
        %v1447 = vpop.f32.mrb[0].mxu0
        %1448 = vmatprep.mubr.bf16.mxu0 0
        %1449 = vmatmul.mubr.bf16.gmra.mrb[0].mxu0 %v1229
        %v1450 = vpop.f32.mrb[0].mxu0
        %v1451 = vadd.f32 %v1270, %v1450
        %v1452 = vpop.f32.mrb[0].mxu0
        %v1453 = vpop.f32.mrb[0].mxu0
        %v1454 = vadd.f32 %v1270, %v1453
        %v1455 = vpop.f32.mrb[0].mxu0
        %1456 = vmatprep.mubr.bf16.mxu0 0
        %1457 = vmatmul.mubr.bf16.gmra.mrb[0].mxu0 %v1230
        %v1458 = vpop.f32.mrb[0].mxu0
        %v1459 = vadd.f32 %v1270, %v1458
        %v1460 = vpop.f32.mrb[0].mxu0
        %v1461 = vpop.f32.mrb[0].mxu0
        %v1462 = vadd.f32 %v1270, %v1461
        %v1463 = vpop.f32.mrb[0].mxu0
        %1464 = vmatprep.mubr.bf16.mxu0 0
        %1465 = vmatmul.mubr.bf16.gmra.mrb[0].mxu0 %v1231
        %v1466 = vpop.f32.mrb[0].mxu0
        %v1467 = vadd.f32 %v1270, %v1466
        %v1468 = vpop.f32.mrb[0].mxu0
        %v1469 = vpop.f32.mrb[0].mxu0
        %v1470 = vadd.f32 %v1270, %v1469
        %v1471 = vpop.f32.mrb[0].mxu0
        %1472 = vmatprep.mubr.bf16.mxu0 0
        %1473 = vmatmul.mubr.bf16.gmra.mrb[0].mxu0 %v1232
        %v1474 = vpop.f32.mrb[0].mxu0
        %v1475 = vadd.f32 %v1270, %v1474
        %v1476 = vpop.f32.mrb[0].mxu0
        %v1477 = vpop.f32.mrb[0].mxu0
        %v1478 = vadd.f32 %v1270, %v1477
        %v1479 = vpop.f32.mrb[0].mxu0
        %1480 = vmatprep.mubr.bf16.mxu0 0
        %1481 = vmatmul.mubr.bf16.gmra.mrb[0].mxu0 %v1233
        %v1482 = vpop.f32.mrb[0].mxu0
        %v1483 = vadd.f32 %v1270, %v1482
        %v1484 = vpop.f32.mrb[0].mxu0
        %v1485 = vpop.f32.mrb[0].mxu0
        %v1486 = vadd.f32 %v1270, %v1485
        %v1487 = vpop.f32.mrb[0].mxu0
        %1488 = vmatprep.mubr.bf16.mxu0 0
        %1489 = vmatmul.mubr.bf16.gmra.mrb[0].mxu0 %v1234
        %v1490 = vpop.f32.mrb[0].mxu0
        %v1491 = vadd.f32 %v1270, %v1490
        %v1492 = vpop.f32.mrb[0].mxu0
        %v1493 = vpop.f32.mrb[0].mxu0
        %v1494 = vadd.f32 %v1270, %v1493
        %v1495 = vpop.f32.mrb[0].mxu0
        %1496 = vmatprep.mubr.bf16.mxu0 0
        %1497 = vmatmul.mubr.bf16.gmra.mrb[0].mxu0 %v1235
        %v1498 = vpop.f32.mrb[0].mxu0
        %v1499 = vadd.f32 %v1270, %v1498
        %v1500 = vpop.f32.mrb[0].mxu0
        %v1501 = vpop.f32.mrb[0].mxu0
        %v1502 = vadd.f32 %v1270, %v1501
        %v1503 = vpop.f32.mrb[0].mxu0
        %1504 = vmatprep.mubr.bf16.mxu0 0
        %1505 = vmatmul.mubr.bf16.gmra.mrb[0].mxu0 %v1236
        %v1506 = vpop.f32.mrb[0].mxu0
        %v1507 = vadd.f32 %v1270, %v1506
        %v1508 = vpop.f32.mrb[0].mxu0
        %v1509 = vpop.f32.mrb[0].mxu0
        %v1510 = vadd.f32 %v1270, %v1509
        %v1511 = vpop.f32.mrb[0].mxu0
        %1512 = vmatprep.mubr.bf16.mxu0 0
        %1513 = vmatmul.mubr.bf16.gmra.mrb[0].mxu0 %v1237
        %v1514 = vpop.f32.mrb[0].mxu0
        %v1515 = vadd.f32 %v1270, %v1514
        %v1516 = vpop.f32.mrb[0].mxu0
        %v1517 = vpop.f32.mrb[0].mxu0
        %v1518 = vadd.f32 %v1270, %v1517
        %v1519 = vpop.f32.mrb[0].mxu0
        %1520 = vmatprep.mubr.bf16.mxu0 0
        %1521 = vmatmul.mubr.bf16.gmra.mrb[0].mxu0 %v1238
        %v1522 = vpop.f32.mrb[0].mxu0
        %v1523 = vadd.f32 %v1270, %v1522
        %v1524 = vpop.f32.mrb[0].mxu0
        %v1525 = vpop.f32.mrb[0].mxu0
        %v1526 = vadd.f32 %v1270, %v1525
        %v1527 = vpop.f32.mrb[0].mxu0
        %1528 = vmatprep.mubr.bf16.mxu0 0
        %1529 = vmatmul.mubr.bf16.gmra.mrb[0].mxu0 %v1239
        %v1530 = vpop.f32.mrb[0].mxu0
        %v1531 = vadd.f32 %v1270, %v1530
        %v1532 = vpop.f32.mrb[0].mxu0
        %v1533 = vpop.f32.mrb[0].mxu0
        %v1534 = vadd.f32 %v1270, %v1533
        %v1535 = vpop.f32.mrb[0].mxu0
        %1536 = vmatprep.mubr.bf16.mxu0 0
        %1537 = vmatmul.mubr.bf16.gmra.mrb[0].mxu0 %v1240
        %v1538 = vpop.f32.mrb[0].mxu0
        %v1539 = vadd.f32 %v1270, %v1538
        %v1540 = vpop.f32.mrb[0].mxu0
        %v1541 = vpop.f32.mrb[0].mxu0
        %v1542 = vadd.f32 %v1270, %v1541
        %v1543 = vpop.f32.mrb[0].mxu0
        %1544 = vmatprep.mubr.bf16.mxu0 0
        %1545 = vmatmul.mubr.bf16.gmra.mrb[0].mxu0 %v1241
        %v1546 = vpop.f32.mrb[0].mxu0
        %v1547 = vadd.f32 %v1270, %v1546
        %v1548 = vpop.f32.mrb[0].mxu0
        %v1549 = vpop.f32.mrb[0].mxu0
        %v1550 = vadd.f32 %v1270, %v1549
        %v1551 = vpop.f32.mrb[0].mxu0
        %1552 = vmatprep.mubr.bf16.mxu0 0
        %1553 = vmatmul.mubr.bf16.gmra.mrb[0].mxu0 %v1242
        %v1554 = vpop.f32.mrb[0].mxu0
        %v1555 = vadd.f32 %v1270, %v1554
        %v1556 = vpop.f32.mrb[0].mxu0
        %v1557 = vpop.f32.mrb[0].mxu0
        %v1558 = vadd.f32 %v1270, %v1557
        %v1559 = vpop.f32.mrb[0].mxu0
        %1560 = vmatprep.mubr.bf16.mxu0 0
        %1561 = vmatmul.mubr.bf16.gmra.mrb[0].mxu0 %v1243
        %v1562 = vpop.f32.mrb[0].mxu0
        %v1563 = vadd.f32 %v1270, %v1562
        %v1564 = vpop.f32.mrb[0].mxu0
        %v1565 = vpop.f32.mrb[0].mxu0
        %v1566 = vadd.f32 %v1270, %v1565
        %v1567 = vpop.f32.mrb[0].mxu0
        %1568 = vmatprep.mubr.bf16.mxu0 0
        %1569 = vmatmul.mubr.bf16.gmra.mrb[0].mxu0 %v1244
        %v1570 = vpop.f32.mrb[0].mxu0
        %v1571 = vadd.f32 %v1270, %v1570
        %v1572 = vpop.f32.mrb[0].mxu0
        %v1573 = vpop.f32.mrb[0].mxu0
        %v1574 = vadd.f32 %v1270, %v1573
        %v1575 = vpop.f32.mrb[0].mxu0
        %1576 = vmatprep.mubr.bf16.mxu0 0
        %1577 = vmatmul.mubr.bf16.gmra.mrb[0].mxu0 %v1245
        %v1578 = vpop.f32.mrb[0].mxu0
        %v1579 = vadd.f32 %v1270, %v1578
        %v1580 = vpop.f32.mrb[0].mxu0
        %v1581 = vpop.f32.mrb[0].mxu0
        %v1582 = vadd.f32 %v1270, %v1581
        %v1583 = vpop.f32.mrb[0].mxu0
        %1584 = vmatprep.mubr.bf16.mxu0 0
        %1585 = vmatmul.mubr.bf16.gmra.mrb[0].mxu0 %v1246
        %v1586 = vpop.f32.mrb[0].mxu0
        %v1587 = vadd.f32 %v1270, %v1586
        %v1588 = vpop.f32.mrb[0].mxu0
        %v1589 = vpop.f32.mrb[0].mxu0
        %v1590 = vadd.f32 %v1270, %v1589
        %v1591 = vpop.f32.mrb[0].mxu0
        %1592 = vmatprep.mubr.bf16.mxu0 0
        %1593 = vmatmul.mubr.bf16.gmra.mrb[0].mxu0 %v1247
        %v1594 = vpop.f32.mrb[0].mxu0
        %v1595 = vadd.f32 %v1270, %v1594
        %v1596 = vpop.f32.mrb[0].mxu0
        %v1597 = vpop.f32.mrb[0].mxu0
        %v1598 = vadd.f32 %v1270, %v1597
        %v1599 = vpop.f32.mrb[0].mxu0
        %1600 = vmatprep.mubr.bf16.mxu0 0
        %1601 = vmatmul.mubr.bf16.gmra.mrb[0].mxu0 %v1248
        %v1602 = vpop.f32.mrb[0].mxu0
        %v1603 = vadd.f32 %v1270, %v1602
        %v1604 = vpop.f32.mrb[0].mxu0
        %v1605 = vpop.f32.mrb[0].mxu0
        %v1606 = vadd.f32 %v1270, %v1605
        %v1607 = vpop.f32.mrb[0].mxu0
        %1608 = vdwg.mxu0
        %v1609 = vmax.f32 %v1355, 0.0
        %v1610 = vmax.f32 %v1358, 0.0
        %v1611 = vmax.f32 %v1363, 0.0
        %v1612 = vmax.f32 %v1366, 0.0
        %v1613 = vmax.f32 %v1371, 0.0
        %v1614 = vmax.f32 %v1374, 0.0
        %v1615 = vmax.f32 %v1379, 0.0
        %v1616 = vmax.f32 %v1382, 0.0
        %v1617 = vmax.f32 %v1387, 0.0
        %v1618 = vmax.f32 %v1390, 0.0
        %v1619 = vmax.f32 %v1395, 0.0
        %v1620 = vmax.f32 %v1398, 0.0
        %v1621 = vmax.f32 %v1403, 0.0
        %v1622 = vmax.f32 %v1406, 0.0
        %v1623 = vmax.f32 %v1411, 0.0
        %v1624 = vmax.f32 %v1414, 0.0
        %v1625 = vmax.f32 %v1419, 0.0
        %v1626 = vmax.f32 %v1422, 0.0
        %v1627 = vmax.f32 %v1427, 0.0
        %v1628 = vmax.f32 %v1430, 0.0
        %v1629 = vmax.f32 %v1435, 0.0
        %v1630 = vmax.f32 %v1438, 0.0
        %v1631 = vmax.f32 %v1443, 0.0
        %v1632 = vmax.f32 %v1446, 0.0
        %v1633 = vmax.f32 %v1451, 0.0
        %v1634 = vmax.f32 %v1454, 0.0
        %v1635 = vmax.f32 %v1459, 0.0
        %v1636 = vmax.f32 %v1462, 0.0
        %v1637 = vmax.f32 %v1467, 0.0
        %v1638 = vmax.f32 %v1470, 0.0
        %v1639 = vmax.f32 %v1475, 0.0
        %v1640 = vmax.f32 %v1478, 0.0
        %v1641 = vmax.f32 %v1483, 0.0
        %v1642 = vmax.f32 %v1486, 0.0
        %v1643 = vmax.f32 %v1491, 0.0
        %v1644 = vmax.f32 %v1494, 0.0
        %v1645 = vmax.f32 %v1499, 0.0
        %v1646 = vmax.f32 %v1502, 0.0
        %v1647 = vmax.f32 %v1507, 0.0
        %v1648 = vmax.f32 %v1510, 0.0
        %v1649 = vmax.f32 %v1515, 0.0
        %v1650 = vmax.f32 %v1518, 0.0
        %v1651 = vmax.f32 %v1523, 0.0
        %v1652 = vmax.f32 %v1526, 0.0
        %v1653 = vmax.f32 %v1531, 0.0
        %v1654 = vmax.f32 %v1534, 0.0
        %v1655 = vmax.f32 %v1539, 0.0
        %v1656 = vmax.f32 %v1542, 0.0
        %v1657 = vmax.f32 %v1547, 0.0
        %v1658 = vmax.f32 %v1550, 0.0
        %v1659 = vmax.f32 %v1555, 0.0
        %v1660 = vmax.f32 %v1558, 0.0
        %v1661 = vmax.f32 %v1563, 0.0
        %v1662 = vmax.f32 %v1566, 0.0
        %v1663 = vmax.f32 %v1571, 0.0
        %v1664 = vmax.f32 %v1574, 0.0
        %v1665 = vmax.f32 %v1579, 0.0
        %v1666 = vmax.f32 %v1582, 0.0
        %v1667 = vmax.f32 %v1587, 0.0
        %v1668 = vmax.f32 %v1590, 0.0
        %v1669 = vmax.f32 %v1595, 0.0
        %v1670 = vmax.f32 %v1598, 0.0
        %v1671 = vmax.f32 %v1603, 0.0
        %v1672 = vmax.f32 %v1606, 0.0
        %v1673 = vpack.c.bf16 %v1610, %v1609
        %v1674 = vpack.c.bf16 %v1612, %v1611
        %v1675 = vpack.c.bf16 %v1614, %v1613
        %v1676 = vpack.c.bf16 %v1616, %v1615
        %v1677 = vpack.c.bf16 %v1618, %v1617
        %v1678 = vpack.c.bf16 %v1620, %v1619
        %v1679 = vpack.c.bf16 %v1622, %v1621
        %v1680 = vpack.c.bf16 %v1624, %v1623
        %v1681 = vpack.c.bf16 %v1626, %v1625
        %v1682 = vpack.c.bf16 %v1628, %v1627
        %v1683 = vpack.c.bf16 %v1630, %v1629
        %v1684 = vpack.c.bf16 %v1632, %v1631
        %v1685 = vpack.c.bf16 %v1634, %v1633
        %v1686 = vpack.c.bf16 %v1636, %v1635
        %v1687 = vpack.c.bf16 %v1638, %v1637
        %v1688 = vpack.c.bf16 %v1640, %v1639
        %v1689 = vpack.c.bf16 %v1642, %v1641
        %v1690 = vpack.c.bf16 %v1644, %v1643
        %v1691 = vpack.c.bf16 %v1646, %v1645
        %v1692 = vpack.c.bf16 %v1648, %v1647
        %v1693 = vpack.c.bf16 %v1650, %v1649
        %v1694 = vpack.c.bf16 %v1652, %v1651
        %v1695 = vpack.c.bf16 %v1654, %v1653
        %v1696 = vpack.c.bf16 %v1656, %v1655
        %v1697 = vpack.c.bf16 %v1658, %v1657
        %v1698 = vpack.c.bf16 %v1660, %v1659
        %v1699 = vpack.c.bf16 %v1662, %v1661
        %v1700 = vpack.c.bf16 %v1664, %v1663
        %v1701 = vpack.c.bf16 %v1666, %v1665
        %v1702 = vpack.c.bf16 %v1668, %v1667
        %v1703 = vpack.c.bf16 %v1670, %v1669
        %v1704 = vpack.c.bf16 %v1672, %v1671
        %v1705 = vld [vmem:[#allocation8] sm:$0xff]
        %v1706 = vld [vmem:[#allocation8 + $0x8] sm:$0xff]
        %v1707 = vld [vmem:[#allocation8 + $0x10] sm:$0xff]
        %v1708 = vld [vmem:[#allocation8 + $0x18] sm:$0xff]
        %v1709 = vld [vmem:[#allocation8 + $0x20] sm:$0xff]
        %v1710 = vld [vmem:[#allocation8 + $0x28] sm:$0xff]
        %v1711 = vld [vmem:[#allocation8 + $0x30] sm:$0xff]
        %v1712 = vld [vmem:[#allocation8 + $0x38] sm:$0xff]
        %v1713 = vld [vmem:[#allocation8 + $0x40] sm:$0xff]
        %v1714 = vld [vmem:[#allocation8 + $0x48] sm:$0xff]
        %v1715 = vld [vmem:[#allocation8 + $0x50] sm:$0xff]
        %v1716 = vld [vmem:[#allocation8 + $0x58] sm:$0xff]
        %v1717 = vld [vmem:[#allocation8 + $0x60] sm:$0xff]
        %v1718 = vld [vmem:[#allocation8 + $0x68] sm:$0xff]
        %v1719 = vld [vmem:[#allocation8 + $0x70] sm:$0xff]
        %v1720 = vld [vmem:[#allocation8 + $0x78] sm:$0xff]
        %v1721 = vld [vmem:[%s6] sm:$0x3]
        %v1723 = vlaneseq
        %v1724 = vshrl.u32 %v1723, 7
        %v1725 = vsub.s32 0, %v1724
        %v1726 = vrot.slane %v1721, %v1725
        %v1727 = vlaneseq
        %v1728 = vshrl.u32 %v1727, 7
        %v1729 = vsub.s32 1, %v1728
        %v1730 = vrot.slane %v1721, %v1729
        %v1749 = vunpack.c.l.b16 %v1705
        %v1750 = vunpack.c.h.b16 %v1705
        %v1751 = vunpack.c.l.b16 %v1706
        %v1752 = vunpack.c.h.b16 %v1706
        %v1753 = vunpack.c.l.b16 %v1707
        %v1754 = vunpack.c.h.b16 %v1707
        %v1755 = vunpack.c.l.b16 %v1708
        %v1756 = vunpack.c.h.b16 %v1708
        %v1757 = vunpack.c.l.b16 %v1709
        %v1758 = vunpack.c.h.b16 %v1709
        %v1759 = vunpack.c.l.b16 %v1710
        %v1760 = vunpack.c.h.b16 %v1710
        %v1761 = vunpack.c.l.b16 %v1711
        %v1762 = vunpack.c.h.b16 %v1711
        %v1763 = vunpack.c.l.b16 %v1712
        %v1764 = vunpack.c.h.b16 %v1712
        %v1765 = vunpack.c.l.b16 %v1713
        %v1766 = vunpack.c.h.b16 %v1713
        %v1767 = vunpack.c.l.b16 %v1714
        %v1768 = vunpack.c.h.b16 %v1714
        %v1769 = vunpack.c.l.b16 %v1715
        %v1770 = vunpack.c.h.b16 %v1715
        %v1771 = vunpack.c.l.b16 %v1716
        %v1772 = vunpack.c.h.b16 %v1716
        %v1773 = vunpack.c.l.b16 %v1717
        %v1774 = vunpack.c.h.b16 %v1717
        %v1775 = vunpack.c.l.b16 %v1718
        %v1776 = vunpack.c.h.b16 %v1718
        %v1777 = vunpack.c.l.b16 %v1719
        %v1778 = vunpack.c.h.b16 %v1719
        %v1779 = vunpack.c.l.b16 %v1720
        %v1780 = vunpack.c.h.b16 %v1720
        %v1781 = vpack.c.b16 %v1751, %v1749
        %v1782 = vpack.c.b16 %v1752, %v1750
        %v1783 = vpack.c.b16 %v1755, %v1753
        %v1784 = vpack.c.b16 %v1756, %v1754
        %v1785 = vpack.c.b16 %v1759, %v1757
        %v1786 = vpack.c.b16 %v1760, %v1758
        %v1787 = vpack.c.b16 %v1763, %v1761
        %v1788 = vpack.c.b16 %v1764, %v1762
        %v1789 = vpack.c.b16 %v1767, %v1765
        %v1790 = vpack.c.b16 %v1768, %v1766
        %v1791 = vpack.c.b16 %v1771, %v1769
        %v1792 = vpack.c.b16 %v1772, %v1770
        %v1793 = vpack.c.b16 %v1775, %v1773
        %v1794 = vpack.c.b16 %v1776, %v1774
        %v1795 = vpack.c.b16 %v1779, %v1777
        %v1796 = vpack.c.b16 %v1780, %v1778
        %1813 = vmatprep.subr.bf16.mxu0 %v1782
        %1814 = vmatpush1.bf16.msra.mxu0 %v1781
        %1815 = vmatprep.subr.bf16.mxu0 %v1784
        %1816 = vmatpush1.bf16.msra.mxu0 %v1783
        %1817 = vmatprep.subr.bf16.mxu0 %v1786
        %1818 = vmatpush1.bf16.msra.mxu0 %v1785
        %1819 = vmatprep.subr.bf16.mxu0 %v1788
        %1820 = vmatpush1.bf16.msra.mxu0 %v1787
        %1821 = vmatprep.subr.bf16.mxu0 %v1790
        %1822 = vmatpush1.bf16.msra.mxu0 %v1789
        %1823 = vmatprep.subr.bf16.mxu0 %v1792
        %1824 = vmatpush1.bf16.msra.mxu0 %v1791
        %1825 = vmatprep.subr.bf16.mxu0 %v1794
        %1826 = vmatpush1.bf16.msra.mxu0 %v1793
        %1827 = vmatprep.subr.bf16.mxu0 %v1796
        %1828 = vmatpush1.bf16.msra.mxu0 %v1795
        %1829 = vmatprep.subr.bf16.mxu0 0
        %1830 = vmatpush1.bf16.msra.mxu0 0
        %1831 = vmatprep.subr.bf16.mxu0 0
        %1832 = vmatpush1.bf16.msra.mxu0 0
        %1833 = vmatprep.subr.bf16.mxu0 0
        %1834 = vmatpush1.bf16.msra.mxu0 0
        %1835 = vmatprep.subr.bf16.mxu0 0
        %1836 = vmatpush1.bf16.msra.mxu0 0
        %1837 = vmatprep.subr.bf16.mxu0 0
        %1838 = vmatpush1.bf16.msra.mxu0 0
        %1839 = vmatprep.subr.bf16.mxu0 0
        %1840 = vmatpush1.bf16.msra.mxu0 0
        %1841 = vmatprep.subr.bf16.mxu0 0
        %1842 = vmatpush1.bf16.msra.mxu0 0
        %1843 = vmatprep.subr.bf16.mxu0 0
        %1844 = vmatpush1.bf16.msra.mxu0 0
        %1845 = vmatprep.mubr.bf16.mxu0 0
        %1846 = vmatmul.mubr.bf16.gmra.mrb[0].mxu0 %v1673
        %v1847 = vpop.f32.mrb[0].mxu0
        %v1848 = vadd.f32 %v1726, %v1847
        %v1849 = vpop.f32.mrb[0].mxu0
        %v1850 = vadd.f32 %v1730, %v1849
        %v1851 = vpop.f32.mrb[0].mxu0
        %v1852 = vadd.f32 %v1726, %v1851
        %v1853 = vpop.f32.mrb[0].mxu0
        %v1854 = vadd.f32 %v1730, %v1853
        %1855 = vmatprep.mubr.bf16.mxu0 0
        %1856 = vmatmul.mubr.bf16.gmra.mrb[0].mxu0 %v1674
        %v1857 = vpop.f32.mrb[0].mxu0
        %v1858 = vadd.f32 %v1726, %v1857
        %v1859 = vpop.f32.mrb[0].mxu0
        %v1860 = vadd.f32 %v1730, %v1859
        %v1861 = vpop.f32.mrb[0].mxu0
        %v1862 = vadd.f32 %v1726, %v1861
        %v1863 = vpop.f32.mrb[0].mxu0
        %v1864 = vadd.f32 %v1730, %v1863
        %1865 = vmatprep.mubr.bf16.mxu0 0
        %1866 = vmatmul.mubr.bf16.gmra.mrb[0].mxu0 %v1675
        %v1867 = vpop.f32.mrb[0].mxu0
        %v1868 = vadd.f32 %v1726, %v1867
        %v1869 = vpop.f32.mrb[0].mxu0
        %v1870 = vadd.f32 %v1730, %v1869
        %v1871 = vpop.f32.mrb[0].mxu0
        %v1872 = vadd.f32 %v1726, %v1871
        %v1873 = vpop.f32.mrb[0].mxu0
        %v1874 = vadd.f32 %v1730, %v1873
        %1875 = vmatprep.mubr.bf16.mxu0 0
        %1876 = vmatmul.mubr.bf16.gmra.mrb[0].mxu0 %v1676
        %v1877 = vpop.f32.mrb[0].mxu0
        %v1878 = vadd.f32 %v1726, %v1877
        %v1879 = vpop.f32.mrb[0].mxu0
        %v1880 = vadd.f32 %v1730, %v1879
        %v1881 = vpop.f32.mrb[0].mxu0
        %v1882 = vadd.f32 %v1726, %v1881
        %v1883 = vpop.f32.mrb[0].mxu0
        %v1884 = vadd.f32 %v1730, %v1883
        %1885 = vmatprep.mubr.bf16.mxu0 0
        %1886 = vmatmul.mubr.bf16.gmra.mrb[0].mxu0 %v1677
        %v1887 = vpop.f32.mrb[0].mxu0
        %v1888 = vadd.f32 %v1726, %v1887
        %v1889 = vpop.f32.mrb[0].mxu0
        %v1890 = vadd.f32 %v1730, %v1889
        %v1891 = vpop.f32.mrb[0].mxu0
        %v1892 = vadd.f32 %v1726, %v1891
        %v1893 = vpop.f32.mrb[0].mxu0
        %v1894 = vadd.f32 %v1730, %v1893
        %1895 = vmatprep.mubr.bf16.mxu0 0
        %1896 = vmatmul.mubr.bf16.gmra.mrb[0].mxu0 %v1678
        %v1897 = vpop.f32.mrb[0].mxu0
        %v1898 = vadd.f32 %v1726, %v1897
        %v1899 = vpop.f32.mrb[0].mxu0
        %v1900 = vadd.f32 %v1730, %v1899
        %v1901 = vpop.f32.mrb[0].mxu0
        %v1902 = vadd.f32 %v1726, %v1901
        %v1903 = vpop.f32.mrb[0].mxu0
        %v1904 = vadd.f32 %v1730, %v1903
        %1905 = vmatprep.mubr.bf16.mxu0 0
        %1906 = vmatmul.mubr.bf16.gmra.mrb[0].mxu0 %v1679
        %v1907 = vpop.f32.mrb[0].mxu0
        %v1908 = vadd.f32 %v1726, %v1907
        %v1909 = vpop.f32.mrb[0].mxu0
        %v1910 = vadd.f32 %v1730, %v1909
        %v1911 = vpop.f32.mrb[0].mxu0
        %v1912 = vadd.f32 %v1726, %v1911
        %v1913 = vpop.f32.mrb[0].mxu0
        %v1914 = vadd.f32 %v1730, %v1913
        %1915 = vmatprep.mubr.bf16.mxu0 0
        %1916 = vmatmul.mubr.bf16.gmra.mrb[0].mxu0 %v1680
        %v1917 = vpop.f32.mrb[0].mxu0
        %v1918 = vadd.f32 %v1726, %v1917
        %v1919 = vpop.f32.mrb[0].mxu0
        %v1920 = vadd.f32 %v1730, %v1919
        %v1921 = vpop.f32.mrb[0].mxu0
        %v1922 = vadd.f32 %v1726, %v1921
        %v1923 = vpop.f32.mrb[0].mxu0
        %v1924 = vadd.f32 %v1730, %v1923
        %1925 = vmatprep.mubr.bf16.mxu0 0
        %1926 = vmatmul.mubr.bf16.gmra.mrb[0].mxu0 %v1681
        %v1927 = vpop.f32.mrb[0].mxu0
        %v1928 = vadd.f32 %v1726, %v1927
        %v1929 = vpop.f32.mrb[0].mxu0
        %v1930 = vadd.f32 %v1730, %v1929
        %v1931 = vpop.f32.mrb[0].mxu0
        %v1932 = vadd.f32 %v1726, %v1931
        %v1933 = vpop.f32.mrb[0].mxu0
        %v1934 = vadd.f32 %v1730, %v1933
        %1935 = vmatprep.mubr.bf16.mxu0 0
        %1936 = vmatmul.mubr.bf16.gmra.mrb[0].mxu0 %v1682
        %v1937 = vpop.f32.mrb[0].mxu0
        %v1938 = vadd.f32 %v1726, %v1937
        %v1939 = vpop.f32.mrb[0].mxu0
        %v1940 = vadd.f32 %v1730, %v1939
        %v1941 = vpop.f32.mrb[0].mxu0
        %v1942 = vadd.f32 %v1726, %v1941
        %v1943 = vpop.f32.mrb[0].mxu0
        %v1944 = vadd.f32 %v1730, %v1943
        %1945 = vmatprep.mubr.bf16.mxu0 0
        %1946 = vmatmul.mubr.bf16.gmra.mrb[0].mxu0 %v1683
        %v1947 = vpop.f32.mrb[0].mxu0
        %v1948 = vadd.f32 %v1726, %v1947
        %v1949 = vpop.f32.mrb[0].mxu0
        %v1950 = vadd.f32 %v1730, %v1949
        %v1951 = vpop.f32.mrb[0].mxu0
        %v1952 = vadd.f32 %v1726, %v1951
        %v1953 = vpop.f32.mrb[0].mxu0
        %v1954 = vadd.f32 %v1730, %v1953
        %1955 = vmatprep.mubr.bf16.mxu0 0
        %1956 = vmatmul.mubr.bf16.gmra.mrb[0].mxu0 %v1684
        %v1957 = vpop.f32.mrb[0].mxu0
        %v1958 = vadd.f32 %v1726, %v1957
        %v1959 = vpop.f32.mrb[0].mxu0
        %v1960 = vadd.f32 %v1730, %v1959
        %v1961 = vpop.f32.mrb[0].mxu0
        %v1962 = vadd.f32 %v1726, %v1961
        %v1963 = vpop.f32.mrb[0].mxu0
        %v1964 = vadd.f32 %v1730, %v1963
        %1965 = vmatprep.mubr.bf16.mxu0 0
        %1966 = vmatmul.mubr.bf16.gmra.mrb[0].mxu0 %v1685
        %v1967 = vpop.f32.mrb[0].mxu0
        %v1968 = vadd.f32 %v1726, %v1967
        %v1969 = vpop.f32.mrb[0].mxu0
        %v1970 = vadd.f32 %v1730, %v1969
        %v1971 = vpop.f32.mrb[0].mxu0
        %v1972 = vadd.f32 %v1726, %v1971
        %v1973 = vpop.f32.mrb[0].mxu0
        %v1974 = vadd.f32 %v1730, %v1973
        %1975 = vmatprep.mubr.bf16.mxu0 0
        %1976 = vmatmul.mubr.bf16.gmra.mrb[0].mxu0 %v1686
        %v1977 = vpop.f32.mrb[0].mxu0
        %v1978 = vadd.f32 %v1726, %v1977
        %v1979 = vpop.f32.mrb[0].mxu0
        %v1980 = vadd.f32 %v1730, %v1979
        %v1981 = vpop.f32.mrb[0].mxu0
        %v1982 = vadd.f32 %v1726, %v1981
        %v1983 = vpop.f32.mrb[0].mxu0
        %v1984 = vadd.f32 %v1730, %v1983
        %1985 = vmatprep.mubr.bf16.mxu0 0
        %1986 = vmatmul.mubr.bf16.gmra.mrb[0].mxu0 %v1687
        %v1987 = vpop.f32.mrb[0].mxu0
        %v1988 = vadd.f32 %v1726, %v1987
        %v1989 = vpop.f32.mrb[0].mxu0
        %v1990 = vadd.f32 %v1730, %v1989
        %v1991 = vpop.f32.mrb[0].mxu0
        %v1992 = vadd.f32 %v1726, %v1991
        %v1993 = vpop.f32.mrb[0].mxu0
        %v1994 = vadd.f32 %v1730, %v1993
        %1995 = vmatprep.mubr.bf16.mxu0 0
        %1996 = vmatmul.mubr.bf16.gmra.mrb[0].mxu0 %v1688
        %v1997 = vpop.f32.mrb[0].mxu0
        %v1998 = vadd.f32 %v1726, %v1997
        %v1999 = vpop.f32.mrb[0].mxu0
        %v2000 = vadd.f32 %v1730, %v1999
        %v2001 = vpop.f32.mrb[0].mxu0
        %v2002 = vadd.f32 %v1726, %v2001
        %v2003 = vpop.f32.mrb[0].mxu0
        %v2004 = vadd.f32 %v1730, %v2003
        %2005 = vmatprep.mubr.bf16.mxu0 0
        %2006 = vmatmul.mubr.bf16.gmra.mrb[0].mxu0 %v1689
        %v2007 = vpop.f32.mrb[0].mxu0
        %v2008 = vadd.f32 %v1726, %v2007
        %v2009 = vpop.f32.mrb[0].mxu0
        %v2010 = vadd.f32 %v1730, %v2009
        %v2011 = vpop.f32.mrb[0].mxu0
        %v2012 = vadd.f32 %v1726, %v2011
        %v2013 = vpop.f32.mrb[0].mxu0
        %v2014 = vadd.f32 %v1730, %v2013
        %2015 = vmatprep.mubr.bf16.mxu0 0
        %2016 = vmatmul.mubr.bf16.gmra.mrb[0].mxu0 %v1690
        %v2017 = vpop.f32.mrb[0].mxu0
        %v2018 = vadd.f32 %v1726, %v2017
        %v2019 = vpop.f32.mrb[0].mxu0
        %v2020 = vadd.f32 %v1730, %v2019
        %v2021 = vpop.f32.mrb[0].mxu0
        %v2022 = vadd.f32 %v1726, %v2021
        %v2023 = vpop.f32.mrb[0].mxu0
        %v2024 = vadd.f32 %v1730, %v2023
        %2025 = vmatprep.mubr.bf16.mxu0 0
        %2026 = vmatmul.mubr.bf16.gmra.mrb[0].mxu0 %v1691
        %v2027 = vpop.f32.mrb[0].mxu0
        %v2028 = vadd.f32 %v1726, %v2027
        %v2029 = vpop.f32.mrb[0].mxu0
        %v2030 = vadd.f32 %v1730, %v2029
        %v2031 = vpop.f32.mrb[0].mxu0
        %v2032 = vadd.f32 %v1726, %v2031
        %v2033 = vpop.f32.mrb[0].mxu0
        %v2034 = vadd.f32 %v1730, %v2033
        %2035 = vmatprep.mubr.bf16.mxu0 0
        %2036 = vmatmul.mubr.bf16.gmra.mrb[0].mxu0 %v1692
        %v2037 = vpop.f32.mrb[0].mxu0
        %v2038 = vadd.f32 %v1726, %v2037
        %v2039 = vpop.f32.mrb[0].mxu0
        %v2040 = vadd.f32 %v1730, %v2039
        %v2041 = vpop.f32.mrb[0].mxu0
        %v2042 = vadd.f32 %v1726, %v2041
        %v2043 = vpop.f32.mrb[0].mxu0
        %v2044 = vadd.f32 %v1730, %v2043
        %2045 = vmatprep.mubr.bf16.mxu0 0
        %2046 = vmatmul.mubr.bf16.gmra.mrb[0].mxu0 %v1693
        %v2047 = vpop.f32.mrb[0].mxu0
        %v2048 = vadd.f32 %v1726, %v2047
        %v2049 = vpop.f32.mrb[0].mxu0
        %v2050 = vadd.f32 %v1730, %v2049
        %v2051 = vpop.f32.mrb[0].mxu0
        %v2052 = vadd.f32 %v1726, %v2051
        %v2053 = vpop.f32.mrb[0].mxu0
        %v2054 = vadd.f32 %v1730, %v2053
        %2055 = vmatprep.mubr.bf16.mxu0 0
        %2056 = vmatmul.mubr.bf16.gmra.mrb[0].mxu0 %v1694
        %v2057 = vpop.f32.mrb[0].mxu0
        %v2058 = vadd.f32 %v1726, %v2057
        %v2059 = vpop.f32.mrb[0].mxu0
        %v2060 = vadd.f32 %v1730, %v2059
        %v2061 = vpop.f32.mrb[0].mxu0
        %v2062 = vadd.f32 %v1726, %v2061
        %v2063 = vpop.f32.mrb[0].mxu0
        %v2064 = vadd.f32 %v1730, %v2063
        %2065 = vmatprep.mubr.bf16.mxu0 0
        %2066 = vmatmul.mubr.bf16.gmra.mrb[0].mxu0 %v1695
        %v2067 = vpop.f32.mrb[0].mxu0
        %v2068 = vadd.f32 %v1726, %v2067
        %v2069 = vpop.f32.mrb[0].mxu0
        %v2070 = vadd.f32 %v1730, %v2069
        %v2071 = vpop.f32.mrb[0].mxu0
        %v2072 = vadd.f32 %v1726, %v2071
        %v2073 = vpop.f32.mrb[0].mxu0
        %v2074 = vadd.f32 %v1730, %v2073
        %2075 = vmatprep.mubr.bf16.mxu0 0
        %2076 = vmatmul.mubr.bf16.gmra.mrb[0].mxu0 %v1696
        %v2077 = vpop.f32.mrb[0].mxu0
        %v2078 = vadd.f32 %v1726, %v2077
        %v2079 = vpop.f32.mrb[0].mxu0
        %v2080 = vadd.f32 %v1730, %v2079
        %v2081 = vpop.f32.mrb[0].mxu0
        %v2082 = vadd.f32 %v1726, %v2081
        %v2083 = vpop.f32.mrb[0].mxu0
        %v2084 = vadd.f32 %v1730, %v2083
        %2085 = vmatprep.mubr.bf16.mxu0 0
        %2086 = vmatmul.mubr.bf16.gmra.mrb[0].mxu0 %v1697
        %v2087 = vpop.f32.mrb[0].mxu0
        %v2088 = vadd.f32 %v1726, %v2087
        %v2089 = vpop.f32.mrb[0].mxu0
        %v2090 = vadd.f32 %v1730, %v2089
        %v2091 = vpop.f32.mrb[0].mxu0
        %v2092 = vadd.f32 %v1726, %v2091
        %v2093 = vpop.f32.mrb[0].mxu0
        %v2094 = vadd.f32 %v1730, %v2093
        %2095 = vmatprep.mubr.bf16.mxu0 0
        %2096 = vmatmul.mubr.bf16.gmra.mrb[0].mxu0 %v1698
        %v2097 = vpop.f32.mrb[0].mxu0
        %v2098 = vadd.f32 %v1726, %v2097
        %v2099 = vpop.f32.mrb[0].mxu0
        %v2100 = vadd.f32 %v1730, %v2099
        %v2101 = vpop.f32.mrb[0].mxu0
        %v2102 = vadd.f32 %v1726, %v2101
        %v2103 = vpop.f32.mrb[0].mxu0
        %v2104 = vadd.f32 %v1730, %v2103
        %2105 = vmatprep.mubr.bf16.mxu0 0
        %2106 = vmatmul.mubr.bf16.gmra.mrb[0].mxu0 %v1699
        %v2107 = vpop.f32.mrb[0].mxu0
        %v2108 = vadd.f32 %v1726, %v2107
        %v2109 = vpop.f32.mrb[0].mxu0
        %v2110 = vadd.f32 %v1730, %v2109
        %v2111 = vpop.f32.mrb[0].mxu0
        %v2112 = vadd.f32 %v1726, %v2111
        %v2113 = vpop.f32.mrb[0].mxu0
        %v2114 = vadd.f32 %v1730, %v2113
        %2115 = vmatprep.mubr.bf16.mxu0 0
        %2116 = vmatmul.mubr.bf16.gmra.mrb[0].mxu0 %v1700
        %v2117 = vpop.f32.mrb[0].mxu0
        %v2118 = vadd.f32 %v1726, %v2117
        %v2119 = vpop.f32.mrb[0].mxu0
        %v2120 = vadd.f32 %v1730, %v2119
        %v2121 = vpop.f32.mrb[0].mxu0
        %v2122 = vadd.f32 %v1726, %v2121
        %v2123 = vpop.f32.mrb[0].mxu0
        %v2124 = vadd.f32 %v1730, %v2123
        %2125 = vmatprep.mubr.bf16.mxu0 0
        %2126 = vmatmul.mubr.bf16.gmra.mrb[0].mxu0 %v1701
        %v2127 = vpop.f32.mrb[0].mxu0
        %v2128 = vadd.f32 %v1726, %v2127
        %v2129 = vpop.f32.mrb[0].mxu0
        %v2130 = vadd.f32 %v1730, %v2129
        %v2131 = vpop.f32.mrb[0].mxu0
        %v2132 = vadd.f32 %v1726, %v2131
        %v2133 = vpop.f32.mrb[0].mxu0
        %v2134 = vadd.f32 %v1730, %v2133
        %2135 = vmatprep.mubr.bf16.mxu0 0
        %2136 = vmatmul.mubr.bf16.gmra.mrb[0].mxu0 %v1702
        %v2137 = vpop.f32.mrb[0].mxu0
        %v2138 = vadd.f32 %v1726, %v2137
        %v2139 = vpop.f32.mrb[0].mxu0
        %v2140 = vadd.f32 %v1730, %v2139
        %v2141 = vpop.f32.mrb[0].mxu0
        %v2142 = vadd.f32 %v1726, %v2141
        %v2143 = vpop.f32.mrb[0].mxu0
        %v2144 = vadd.f32 %v1730, %v2143
        %2145 = vmatprep.mubr.bf16.mxu0 0
        %2146 = vmatmul.mubr.bf16.gmra.mrb[0].mxu0 %v1703
        %v2147 = vpop.f32.mrb[0].mxu0
        %v2148 = vadd.f32 %v1726, %v2147
        %v2149 = vpop.f32.mrb[0].mxu0
        %v2150 = vadd.f32 %v1730, %v2149
        %v2151 = vpop.f32.mrb[0].mxu0
        %v2152 = vadd.f32 %v1726, %v2151
        %v2153 = vpop.f32.mrb[0].mxu0
        %v2154 = vadd.f32 %v1730, %v2153
        %2155 = vmatprep.mubr.bf16.mxu0 0
        %2156 = vmatmul.mubr.bf16.gmra.mrb[0].mxu0 %v1704
        %v2157 = vpop.f32.mrb[0].mxu0
        %v2158 = vadd.f32 %v1726, %v2157
        %v2159 = vpop.f32.mrb[0].mxu0
        %v2160 = vadd.f32 %v1730, %v2159
        %v2161 = vpop.f32.mrb[0].mxu0
        %v2162 = vadd.f32 %v1726, %v2161
        %v2163 = vpop.f32.mrb[0].mxu0
        %v2164 = vadd.f32 %v1730, %v2163
        %2165 = vdwg.mxu0
        %v2166 = vpack.c.bf16 %v1852, %v1848
        %v2167 = vpack.c.bf16 %v1854, %v1850
        %v2168 = vpack.c.bf16 %v1862, %v1858
        %v2169 = vpack.c.bf16 %v1864, %v1860
        %v2170 = vpack.c.bf16 %v1872, %v1868
        %v2171 = vpack.c.bf16 %v1874, %v1870
        %v2172 = vpack.c.bf16 %v1882, %v1878
        %v2173 = vpack.c.bf16 %v1884, %v1880
        %v2174 = vpack.c.bf16 %v1892, %v1888
        %v2175 = vpack.c.bf16 %v1894, %v1890
        %v2176 = vpack.c.bf16 %v1902, %v1898
        %v2177 = vpack.c.bf16 %v1904, %v1900
        %v2178 = vpack.c.bf16 %v1912, %v1908
        %v2179 = vpack.c.bf16 %v1914, %v1910
        %v2180 = vpack.c.bf16 %v1922, %v1918
        %v2181 = vpack.c.bf16 %v1924, %v1920
        %v2182 = vpack.c.bf16 %v1932, %v1928
        %v2183 = vpack.c.bf16 %v1934, %v1930
        %v2184 = vpack.c.bf16 %v1942, %v1938
        %v2185 = vpack.c.bf16 %v1944, %v1940
        %v2186 = vpack.c.bf16 %v1952, %v1948
        %v2187 = vpack.c.bf16 %v1954, %v1950
        %v2188 = vpack.c.bf16 %v1962, %v1958
        %v2189 = vpack.c.bf16 %v1964, %v1960
        %v2190 = vpack.c.bf16 %v1972, %v1968
        %v2191 = vpack.c.bf16 %v1974, %v1970
        %v2192 = vpack.c.bf16 %v1982, %v1978
        %v2193 = vpack.c.bf16 %v1984, %v1980
        %v2194 = vpack.c.bf16 %v1992, %v1988
        %v2195 = vpack.c.bf16 %v1994, %v1990
        %v2196 = vpack.c.bf16 %v2002, %v1998
        %v2197 = vpack.c.bf16 %v2004, %v2000
        %v2198 = vpack.c.bf16 %v2012, %v2008
        %v2199 = vpack.c.bf16 %v2014, %v2010
        %v2200 = vpack.c.bf16 %v2022, %v2018
        %v2201 = vpack.c.bf16 %v2024, %v2020
        %v2202 = vpack.c.bf16 %v2032, %v2028
        %v2203 = vpack.c.bf16 %v2034, %v2030
        %v2204 = vpack.c.bf16 %v2042, %v2038
        %v2205 = vpack.c.bf16 %v2044, %v2040
        %v2206 = vpack.c.bf16 %v2052, %v2048
        %v2207 = vpack.c.bf16 %v2054, %v2050
        %v2208 = vpack.c.bf16 %v2062, %v2058
        %v2209 = vpack.c.bf16 %v2064, %v2060
        %v2210 = vpack.c.bf16 %v2072, %v2068
        %v2211 = vpack.c.bf16 %v2074, %v2070
        %v2212 = vpack.c.bf16 %v2082, %v2078
        %v2213 = vpack.c.bf16 %v2084, %v2080
        %v2214 = vpack.c.bf16 %v2092, %v2088
        %v2215 = vpack.c.bf16 %v2094, %v2090
        %v2216 = vpack.c.bf16 %v2102, %v2098
        %v2217 = vpack.c.bf16 %v2104, %v2100
        %v2218 = vpack.c.bf16 %v2112, %v2108
        %v2219 = vpack.c.bf16 %v2114, %v2110
        %v2220 = vpack.c.bf16 %v2122, %v2118
        %v2221 = vpack.c.bf16 %v2124, %v2120
        %v2222 = vpack.c.bf16 %v2132, %v2128
        %v2223 = vpack.c.bf16 %v2134, %v2130
        %v2224 = vpack.c.bf16 %v2142, %v2138
        %v2225 = vpack.c.bf16 %v2144, %v2140
        %v2226 = vpack.c.bf16 %v2152, %v2148
        %v2227 = vpack.c.bf16 %v2154, %v2150
        %v2228 = vpack.c.bf16 %v2162, %v2158
        %v2229 = vpack.c.bf16 %v2164, %v2160
        %v2294 = vunpack.c.l.b16 %v2166
        %v2295 = vunpack.c.l.b16 %v2167
        %v2296 = vunpack.c.h.b16 %v2166
        %v2297 = vunpack.c.h.b16 %v2167
        %v2298 = vunpack.c.l.b16 %v2168
        %v2299 = vunpack.c.l.b16 %v2169
        %v2300 = vunpack.c.h.b16 %v2168
        %v2301 = vunpack.c.h.b16 %v2169
        %v2302 = vunpack.c.l.b16 %v2170
        %v2303 = vunpack.c.l.b16 %v2171
        %v2304 = vunpack.c.h.b16 %v2170
        %v2305 = vunpack.c.h.b16 %v2171
        %v2306 = vunpack.c.l.b16 %v2172
        %v2307 = vunpack.c.l.b16 %v2173
        %v2308 = vunpack.c.h.b16 %v2172
        %v2309 = vunpack.c.h.b16 %v2173
        %v2310 = vunpack.c.l.b16 %v2174
        %v2311 = vunpack.c.l.b16 %v2175
        %v2312 = vunpack.c.h.b16 %v2174
        %v2313 = vunpack.c.h.b16 %v2175
        %v2314 = vunpack.c.l.b16 %v2176
        %v2315 = vunpack.c.l.b16 %v2177
        %v2316 = vunpack.c.h.b16 %v2176
        %v2317 = vunpack.c.h.b16 %v2177
        %v2318 = vunpack.c.l.b16 %v2178
        %v2319 = vunpack.c.l.b16 %v2179
        %v2320 = vunpack.c.h.b16 %v2178
        %v2321 = vunpack.c.h.b16 %v2179
        %v2322 = vunpack.c.l.b16 %v2180
        %v2323 = vunpack.c.l.b16 %v2181
        %v2324 = vunpack.c.h.b16 %v2180
        %v2325 = vunpack.c.h.b16 %v2181
        %v2326 = vunpack.c.l.b16 %v2182
        %v2327 = vunpack.c.l.b16 %v2183
        %v2328 = vunpack.c.h.b16 %v2182
        %v2329 = vunpack.c.h.b16 %v2183
        %v2330 = vunpack.c.l.b16 %v2184
        %v2331 = vunpack.c.l.b16 %v2185
        %v2332 = vunpack.c.h.b16 %v2184
        %v2333 = vunpack.c.h.b16 %v2185
        %v2334 = vunpack.c.l.b16 %v2186
        %v2335 = vunpack.c.l.b16 %v2187
        %v2336 = vunpack.c.h.b16 %v2186
        %v2337 = vunpack.c.h.b16 %v2187
        %v2338 = vunpack.c.l.b16 %v2188
        %v2339 = vunpack.c.l.b16 %v2189
        %v2340 = vunpack.c.h.b16 %v2188
        %v2341 = vunpack.c.h.b16 %v2189
        %v2342 = vunpack.c.l.b16 %v2190
        %v2343 = vunpack.c.l.b16 %v2191
        %v2344 = vunpack.c.h.b16 %v2190
        %v2345 = vunpack.c.h.b16 %v2191
        %v2346 = vunpack.c.l.b16 %v2192
        %v2347 = vunpack.c.l.b16 %v2193
        %v2348 = vunpack.c.h.b16 %v2192
        %v2349 = vunpack.c.h.b16 %v2193
        %v2350 = vunpack.c.l.b16 %v2194
        %v2351 = vunpack.c.l.b16 %v2195
        %v2352 = vunpack.c.h.b16 %v2194
        %v2353 = vunpack.c.h.b16 %v2195
        %v2354 = vunpack.c.l.b16 %v2196
        %v2355 = vunpack.c.l.b16 %v2197
        %v2356 = vunpack.c.h.b16 %v2196
        %v2357 = vunpack.c.h.b16 %v2197
        %v2358 = vunpack.c.l.b16 %v2198
        %v2359 = vunpack.c.l.b16 %v2199
        %v2360 = vunpack.c.h.b16 %v2198
        %v2361 = vunpack.c.h.b16 %v2199
        %v2362 = vunpack.c.l.b16 %v2200
        %v2363 = vunpack.c.l.b16 %v2201
        %v2364 = vunpack.c.h.b16 %v2200
        %v2365 = vunpack.c.h.b16 %v2201
        %v2366 = vunpack.c.l.b16 %v2202
        %v2367 = vunpack.c.l.b16 %v2203
        %v2368 = vunpack.c.h.b16 %v2202
        %v2369 = vunpack.c.h.b16 %v2203
        %v2370 = vunpack.c.l.b16 %v2204
        %v2371 = vunpack.c.l.b16 %v2205
        %v2372 = vunpack.c.h.b16 %v2204
        %v2373 = vunpack.c.h.b16 %v2205
        %v2374 = vunpack.c.l.b16 %v2206
        %v2375 = vunpack.c.l.b16 %v2207
        %v2376 = vunpack.c.h.b16 %v2206
        %v2377 = vunpack.c.h.b16 %v2207
        %v2378 = vunpack.c.l.b16 %v2208
        %v2379 = vunpack.c.l.b16 %v2209
        %v2380 = vunpack.c.h.b16 %v2208
        %v2381 = vunpack.c.h.b16 %v2209
        %v2382 = vunpack.c.l.b16 %v2210
        %v2383 = vunpack.c.l.b16 %v2211
        %v2384 = vunpack.c.h.b16 %v2210
        %v2385 = vunpack.c.h.b16 %v2211
        %v2386 = vunpack.c.l.b16 %v2212
        %v2387 = vunpack.c.l.b16 %v2213
        %v2388 = vunpack.c.h.b16 %v2212
        %v2389 = vunpack.c.h.b16 %v2213
        %v2390 = vunpack.c.l.b16 %v2214
        %v2391 = vunpack.c.l.b16 %v2215
        %v2392 = vunpack.c.h.b16 %v2214
        %v2393 = vunpack.c.h.b16 %v2215
        %v2394 = vunpack.c.l.b16 %v2216
        %v2395 = vunpack.c.l.b16 %v2217
        %v2396 = vunpack.c.h.b16 %v2216
        %v2397 = vunpack.c.h.b16 %v2217
        %v2398 = vunpack.c.l.b16 %v2218
        %v2399 = vunpack.c.l.b16 %v2219
        %v2400 = vunpack.c.h.b16 %v2218
        %v2401 = vunpack.c.h.b16 %v2219
        %v2402 = vunpack.c.l.b16 %v2220
        %v2403 = vunpack.c.l.b16 %v2221
        %v2404 = vunpack.c.h.b16 %v2220
        %v2405 = vunpack.c.h.b16 %v2221
        %v2406 = vunpack.c.l.b16 %v2222
        %v2407 = vunpack.c.l.b16 %v2223
        %v2408 = vunpack.c.h.b16 %v2222
        %v2409 = vunpack.c.h.b16 %v2223
        %v2410 = vunpack.c.l.b16 %v2224
        %v2411 = vunpack.c.l.b16 %v2225
        %v2412 = vunpack.c.h.b16 %v2224
        %v2413 = vunpack.c.h.b16 %v2225
        %v2414 = vunpack.c.l.b16 %v2226
        %v2415 = vunpack.c.l.b16 %v2227
        %v2416 = vunpack.c.h.b16 %v2226
        %v2417 = vunpack.c.h.b16 %v2227
        %v2418 = vunpack.c.l.b16 %v2228
        %v2419 = vunpack.c.l.b16 %v2229
        %v2420 = vunpack.c.h.b16 %v2228
        %v2421 = vunpack.c.h.b16 %v2229
        %v2422 = vpack.c.b16 %v2295, %v2294
        %v2423 = vpack.c.b16 %v2297, %v2296
        %v2424 = vpack.c.b16 %v2299, %v2298
        %v2425 = vpack.c.b16 %v2301, %v2300
        %v2426 = vpack.c.b16 %v2303, %v2302
        %v2427 = vpack.c.b16 %v2305, %v2304
        %v2428 = vpack.c.b16 %v2307, %v2306
        %v2429 = vpack.c.b16 %v2309, %v2308
        %v2430 = vpack.c.b16 %v2311, %v2310
        %v2431 = vpack.c.b16 %v2313, %v2312
        %v2432 = vpack.c.b16 %v2315, %v2314
        %v2433 = vpack.c.b16 %v2317, %v2316
        %v2434 = vpack.c.b16 %v2319, %v2318
        %v2435 = vpack.c.b16 %v2321, %v2320
        %v2436 = vpack.c.b16 %v2323, %v2322
        %v2437 = vpack.c.b16 %v2325, %v2324
        %v2438 = vpack.c.b16 %v2327, %v2326
        %v2439 = vpack.c.b16 %v2329, %v2328
        %v2440 = vpack.c.b16 %v2331, %v2330
        %v2441 = vpack.c.b16 %v2333, %v2332
        %v2442 = vpack.c.b16 %v2335, %v2334
        %v2443 = vpack.c.b16 %v2337, %v2336
        %v2444 = vpack.c.b16 %v2339, %v2338
        %v2445 = vpack.c.b16 %v2341, %v2340
        %v2446 = vpack.c.b16 %v2343, %v2342
        %v2447 = vpack.c.b16 %v2345, %v2344
        %v2448 = vpack.c.b16 %v2347, %v2346
        %v2449 = vpack.c.b16 %v2349, %v2348
        %v2450 = vpack.c.b16 %v2351, %v2350
        %v2451 = vpack.c.b16 %v2353, %v2352
        %v2452 = vpack.c.b16 %v2355, %v2354
        %v2453 = vpack.c.b16 %v2357, %v2356
        %v2454 = vpack.c.b16 %v2359, %v2358
        %v2455 = vpack.c.b16 %v2361, %v2360
        %v2456 = vpack.c.b16 %v2363, %v2362
        %v2457 = vpack.c.b16 %v2365, %v2364
        %v2458 = vpack.c.b16 %v2367, %v2366
        %v2459 = vpack.c.b16 %v2369, %v2368
        %v2460 = vpack.c.b16 %v2371, %v2370
        %v2461 = vpack.c.b16 %v2373, %v2372
        %v2462 = vpack.c.b16 %v2375, %v2374
        %v2463 = vpack.c.b16 %v2377, %v2376
        %v2464 = vpack.c.b16 %v2379, %v2378
        %v2465 = vpack.c.b16 %v2381, %v2380
        %v2466 = vpack.c.b16 %v2383, %v2382
        %v2467 = vpack.c.b16 %v2385, %v2384
        %v2468 = vpack.c.b16 %v2387, %v2386
        %v2469 = vpack.c.b16 %v2389, %v2388
        %v2470 = vpack.c.b16 %v2391, %v2390
        %v2471 = vpack.c.b16 %v2393, %v2392
        %v2472 = vpack.c.b16 %v2395, %v2394
        %v2473 = vpack.c.b16 %v2397, %v2396
        %v2474 = vpack.c.b16 %v2399, %v2398
        %v2475 = vpack.c.b16 %v2401, %v2400
        %v2476 = vpack.c.b16 %v2403, %v2402
        %v2477 = vpack.c.b16 %v2405, %v2404
        %v2478 = vpack.c.b16 %v2407, %v2406
        %v2479 = vpack.c.b16 %v2409, %v2408
        %v2480 = vpack.c.b16 %v2411, %v2410
        %v2481 = vpack.c.b16 %v2413, %v2412
        %v2482 = vpack.c.b16 %v2415, %v2414
        %v2483 = vpack.c.b16 %v2417, %v2416
        %v2484 = vpack.c.b16 %v2419, %v2418
        %v2485 = vpack.c.b16 %v2421, %v2420
        %2550 = vst [vmem:[%s341] sm:$0xff] %v2422
        %2551 = vst [vmem:[%s341 + $0x8] sm:$0xff] %v2423
        %2552 = vst [vmem:[%s341 + $0x10] sm:$0xff] %v2424
        %2553 = vst [vmem:[%s341 + $0x18] sm:$0xff] %v2425
        %2554 = vst [vmem:[%s341 + $0x20] sm:$0xff] %v2426
        %2555 = vst [vmem:[%s341 + $0x28] sm:$0xff] %v2427
        %2556 = vst [vmem:[%s341 + $0x30] sm:$0xff] %v2428
        %2557 = vst [vmem:[%s341 + $0x38] sm:$0xff] %v2429
        %2558 = vst [vmem:[%s341 + $0x40] sm:$0xff] %v2430
        %2559 = vst [vmem:[%s341 + $0x48] sm:$0xff] %v2431
        %2560 = vst [vmem:[%s341 + $0x50] sm:$0xff] %v2432
        %2561 = vst [vmem:[%s341 + $0x58] sm:$0xff] %v2433
        %2562 = vst [vmem:[%s341 + $0x60] sm:$0xff] %v2434
        %2563 = vst [vmem:[%s341 + $0x68] sm:$0xff] %v2435
        %2564 = vst [vmem:[%s341 + $0x70] sm:$0xff] %v2436
        %2565 = vst [vmem:[%s341 + $0x78] sm:$0xff] %v2437
        %2566 = vst [vmem:[%s341 + $0x80] sm:$0xff] %v2438
        %2567 = vst [vmem:[%s341 + $0x88] sm:$0xff] %v2439
        %2568 = vst [vmem:[%s341 + $0x90] sm:$0xff] %v2440
        %2569 = vst [vmem:[%s341 + $0x98] sm:$0xff] %v2441
        %2570 = vst [vmem:[%s341 + $0xa0] sm:$0xff] %v2442
        %2571 = vst [vmem:[%s341 + $0xa8] sm:$0xff] %v2443
        %2572 = vst [vmem:[%s341 + $0xb0] sm:$0xff] %v2444
        %2573 = vst [vmem:[%s341 + $0xb8] sm:$0xff] %v2445
        %2574 = vst [vmem:[%s341 + $0xc0] sm:$0xff] %v2446
        %2575 = vst [vmem:[%s341 + $0xc8] sm:$0xff] %v2447
        %2576 = vst [vmem:[%s341 + $0xd0] sm:$0xff] %v2448
        %2577 = vst [vmem:[%s341 + $0xd8] sm:$0xff] %v2449
        %2578 = vst [vmem:[%s341 + $0xe0] sm:$0xff] %v2450
        %2579 = vst [vmem:[%s341 + $0xe8] sm:$0xff] %v2451
        %2580 = vst [vmem:[%s341 + $0xf0] sm:$0xff] %v2452
        %2581 = vst [vmem:[%s341 + $0xf8] sm:$0xff] %v2453
        %2582 = vst [vmem:[%s341 + $0x100] sm:$0xff] %v2454
        %2583 = vst [vmem:[%s341 + $0x108] sm:$0xff] %v2455
        %2584 = vst [vmem:[%s341 + $0x110] sm:$0xff] %v2456
        %2585 = vst [vmem:[%s341 + $0x118] sm:$0xff] %v2457
        %2586 = vst [vmem:[%s341 + $0x120] sm:$0xff] %v2458
        %2587 = vst [vmem:[%s341 + $0x128] sm:$0xff] %v2459
        %2588 = vst [vmem:[%s341 + $0x130] sm:$0xff] %v2460
        %2589 = vst [vmem:[%s341 + $0x138] sm:$0xff] %v2461
        %2590 = vst [vmem:[%s341 + $0x140] sm:$0xff] %v2462
        %2591 = vst [vmem:[%s341 + $0x148] sm:$0xff] %v2463
        %2592 = vst [vmem:[%s341 + $0x150] sm:$0xff] %v2464
        %2593 = vst [vmem:[%s341 + $0x158] sm:$0xff] %v2465
        %2594 = vst [vmem:[%s341 + $0x160] sm:$0xff] %v2466
        %2595 = vst [vmem:[%s341 + $0x168] sm:$0xff] %v2467
        %2596 = vst [vmem:[%s341 + $0x170] sm:$0xff] %v2468
        %2597 = vst [vmem:[%s341 + $0x178] sm:$0xff] %v2469
        %2598 = vst [vmem:[%s341 + $0x180] sm:$0xff] %v2470
        %2599 = vst [vmem:[%s341 + $0x188] sm:$0xff] %v2471
        %2600 = vst [vmem:[%s341 + $0x190] sm:$0xff] %v2472
        %2601 = vst [vmem:[%s341 + $0x198] sm:$0xff] %v2473
        %2602 = vst [vmem:[%s341 + $0x1a0] sm:$0xff] %v2474
        %2603 = vst [vmem:[%s341 + $0x1a8] sm:$0xff] %v2475
        %2604 = vst [vmem:[%s341 + $0x1b0] sm:$0xff] %v2476
        %2605 = vst [vmem:[%s341 + $0x1b8] sm:$0xff] %v2477
        %2606 = vst [vmem:[%s341 + $0x1c0] sm:$0xff] %v2478
        %2607 = vst [vmem:[%s341 + $0x1c8] sm:$0xff] %v2479
        %2608 = vst [vmem:[%s341 + $0x1d0] sm:$0xff] %v2480
        %2609 = vst [vmem:[%s341 + $0x1d8] sm:$0xff] %v2481
        %2610 = vst [vmem:[%s341 + $0x1e0] sm:$0xff] %v2482
        %2611 = vst [vmem:[%s341 + $0x1e8] sm:$0xff] %v2483
        %2612 = vst [vmem:[%s341 + $0x1f0] sm:$0xff] %v2484
        %2613 = vst [vmem:[%s341 + $0x1f8] sm:$0xff] %v2485
        %s2614 = sand.u32 %s186, 1
        %s2615 = scalar_lea.sflag [#allocation4], %s2614
        %s2616 = sand.u32 %s186, 1
        %s2617 = smul.addr %s2616, 512
        %s2618 = scalar_lea.vmem [#allocation10], %s2617
        // Predicated region
        $region65: #{tpu_custom_call.1} parent=47 // pred_check
          %p2619 = pneg %p196
        $region66: #{tpu_custom_call.1} parent=47 // pred_check_branch
          %2621 = sbr.rel (%p2619) target = $region68
        $region67: #{tpu_custom_call.1} parent=47 // pred_region
          %s2622 = smul.u32 64, %s26
          %s2624 = ssub.s32 8192, 8192
          %2625 = vsyncadd %s2615, %s2624
          %s2626 = smul.addr %s2622, 2
          %s2627 = smul.addr %s2626, 64
          %s2628 = scalar_lea.hbm %s7, %s2627
          %s2629 = sshll.u32 %s2618, 4
          %s2630 = int_to_ptr.vmem [resolvable:$true] %s2629
          %2635 = dma.vmem_to_hbm [thread:$0]  %s2630, 8192, %s2628, %s2615, 128, 128, 8
        $region68: #{tpu_custom_call.1} parent=47 // pred_fallthru
          _
      $region48: #{tpu_custom_call.1} parent=5 // pred_fallthru
        _
      %p2636 = scmp.le.s32.totalorder 2, %s21
      // Predicated region
      $region69: #{tpu_custom_call.1} parent=5 // pred_check
        %p2637 = pneg %p2636
      $region70: #{tpu_custom_call.1} parent=5 // pred_check_branch
        %2639 = sbr.rel (%p2637) target = $region72
      $region71: #{tpu_custom_call.1} parent=5 // pred_region
        %s2640 = ssub.s32 %s21, 2
        // Predicated region
        $region73: #{tpu_custom_call.1} parent=71 // pred_check
          %p2641 = pneg %p202
        $region74: #{tpu_custom_call.1} parent=71 // pred_check_branch
          %2643 = sbr.rel (%p2641) target = $region76
        $region75: #{tpu_custom_call.1} parent=71 // pred_region
          %s2644 = sand.u32 %s187, 1
          %s2645 = scalar_lea.sflag [#allocation4], %s2644
          %s2646 = sand.u32 %s187, 1
          %s2647 = smul.addr %s2646, 512
          %s2648 = scalar_lea.vmem [#allocation10], %s2647
          %2649 = dma.done %s2645, 8192
        $region76: #{tpu_custom_call.1} parent=71 // pred_fallthru
          _
      $region72: #{tpu_custom_call.1} parent=5 // pred_fallthru
        _
    $region6: #{tpu_custom_call.1} parent=1 // loop_footer
      %s25 = sadd.s32 1, %s21
    $region7: #{tpu_custom_call.1} parent=1 // loop_footer_branch
      %20 = sbr.rel target = $region3
    $region8: #{tpu_custom_call.1} parent=1 // loop_exit
      _
    %2650 = vsyncpa [#allocation3], 1
    %s2651 = scalar_lea.sflag [#allocation3], 1
    %2652 = vsyncpa %s2651, 1
    %2653 = vsyncpa [#allocation6], 1
    %2654 = vsyncpa [#allocation9], 1
    %2655 = vsyncpa [#allocation4], 1
    %s2656 = scalar_lea.sflag [#allocation4], 1
    %2657 = vsyncpa %s2656, 1

</llo_original>
